<compile_context>
chip_gen: v7x
topology: tpu7x:2x2x1
jax: 0.10.0
libtpu: 0.0.40
codegen_flags: <defaults>
</compile_context>

<pallas_src>
import jax
import jax.numpy as jnp
from jax.experimental import pallas as pl
from jax.experimental.pallas import tpu as pltpu

CIN = 1
COUT = 8
K = 3
H = W = 16
HW = H * W              # 256  (lane-dense flattened spatial dim)
FEAT = COUT * HW        # 2048 (FC input features, (c, h, w) flatten)
EMB = 32
LOG2W = 4               # log2(W); W must be 16
SUB = 16                # rows per inner sub-chunk (bounds conv vreg live range)
MAX_TILE = 256          # max batch rows per grid step


# ----------------------------------------------------------------------------
# Fused Pallas kernel
# ----------------------------------------------------------------------------

def _fused_embed_kernel(x_ref, convw_ref, convb_ref, fcw_ref, fcb_ref, out_ref):
    """Fused Conv3x3(pad=1) + bias + ReLU + flatten + Linear(2048 -> 32).

    x_ref    : [TB, 256]   f32  VMEM  (flattened 16x16 image, p = 16*h + w)
    convw_ref: [72]        f32  SMEM  (convw[t*8 + c] = W[c, 0, kh, kw], t = kh*3 + kw)
    convb_ref: [8]         f32  SMEM
    fcw_ref  : [32, 2048]  bf16 VMEM  (nn.Linear weight [out, in], lane-dense)
    fcb_ref  : [1, 32]     f32  VMEM
    out_ref  : [TB, 32]    f32  VMEM
    """
    tb = x_ref.shape[0]
    n_sub = tb // SUB

    # Per-lane (h, w) coordinates of the flattened pixel p = 16*h + w, and the
    # 4 boundary-validity masks shared by all taps (computed once per tile).
    p = jax.lax.broadcasted_iota(jnp.int32, (SUB, HW), dimension=1)
    h_idx = jnp.right_shift(p, LOG2W)
    w_idx = jnp.bitwise_and(p, W - 1)
    h_ok = {-1: h_idx >= 1, 0: None, 1: h_idx < H - 1}
    w_ok = {-1: w_idx >= 1, 0: None, 1: w_idx < W - 1}

    def tap_mask(dh, dw):
        hm, wm = h_ok[dh], w_ok[dw]
        if hm is None:
            return wm
        if wm is None:
            return hm
        return jnp.logical_and(hm, wm)

    def sub_body(s, carry):
        r0 = pl.multiple_of(s * SUB, SUB)
        x = x_ref[pl.ds(r0, SUB), :]                          # [SUB, 256] f32

        # 9 shifted + zero-masked copies of the image:
        #   tap(dh, dw)[b, p] = x[b, h+dh, w+dw]  (0 outside the image).
        taps = []
        for dh in (-1, 0, 1):
            for dw in (-1, 0, 1):
                sft = dh * W + dw                             # flat-index shift
                shifted = x if sft == 0 else pltpu.roll(x, (-sft) % HW, 1)
                m = tap_mask(dh, dw)
                taps.append(shifted if m is None else jnp.where(m, shifted, 0.0))

        # Per channel: 9 VPU MACs + bias + ReLU, then a partial MXU dot against
        # the matching 256-column slice of the FC weight, accumulated in f32.
        acc = jnp.zeros((SUB, EMB), jnp.float32)
        for c in range(COUT):
            a = taps[0] * convw_ref[c]
            for t in range(1, K * K):
                a = a + taps[t] * convw_ref[t * COUT + c]
            a = jnp.maximum(a + convb_ref[c], 0.0).astype(jnp.bfloat16)
            acc = acc + jax.lax.dot_general(
                a, fcw_ref[:, c * HW:(c + 1) * HW],
                dimension_numbers=(((1,), (1,)), ((), ())),
                preferred_element_type=jnp.float32)           # [SUB, 32]

        out_ref[pl.ds(r0, SUB), :] = (acc + fcb_ref[...]).astype(out_ref.dtype)
        return carry

    jax.lax.fori_loop(0, n_sub, sub_body, 0, unroll=True)


# ----------------------------------------------------------------------------
# Tiling helper, parameters, forward wrapper
# ----------------------------------------------------------------------------

def _tiling(batch):
    """Return (batch_tile, padded_batch): tile is a multiple of 16 rows."""
    def rup(n, m):
        return ((n + m - 1) // m) * m
    bp = rup(batch, SUB)
    if bp <= 2 * SUB:                                   # tiny batch: one grid step
        return bp, bp
    tb = min(MAX_TILE, rup(bp // 2, SUB))               # >= 2 parallel steps (v7x)
    bp = rup(bp, tb)
    return tb, bp


def init_params(key):
    k1, k2, k3, k4 = jax.random.split(key, 4)
    conv_w = jax.random.normal(k1, (COUT, CIN, K, K), jnp.float32) * 0.1
    conv_b = jax.random.normal(k2, (COUT,), jnp.float32) * 0.1
    fc_w = jax.random.normal(k3, (EMB, FEAT), jnp.float32) * 0.02   # [out, in]
    fc_b = jax.random.normal(k4, (EMB,), jnp.float32) * 0.02
    return conv_w, conv_b, fc_w, fc_b


@jax.jit
def triplet_forward(x_nchw, conv_w, conv_b, fc_w, fc_b):
    """TripletModel.forward: returns embedding_model(x). x is NCHW f32 [B,1,16,16]."""
    B = x_nchw.shape[0]
    x_flat = x_nchw.reshape(B, HW).astype(jnp.float32)        # C=1 => [B, 256]

    tb, bp = _tiling(B)
    if bp != B:
        x_flat = jnp.pad(x_flat, ((0, bp - B), (0, 0)))

    conv_w_flat = conv_w.reshape(COUT, K * K).T.reshape(-1)   # [72], tap-major
    conv_b_flat = conv_b.reshape(-1)                          # [8]
    fc_w_bf16 = fc_w.astype(jnp.bfloat16)                     # lane-dense [32, 2048]
    fc_b_2d = fc_b.reshape(1, EMB).astype(jnp.float32)

    flops = 2 * bp * (COUT * HW * K * K + FEAT * EMB)
    bytes_accessed = (bp * HW * 4 + EMB * FEAT * 2 + bp * EMB * 4
                      + (K * K * COUT + COUT + EMB) * 4)

    out = pl.pallas_call(
        _fused_embed_kernel,
        out_shape=jax.ShapeDtypeStruct((bp, EMB), jnp.float32),
        grid_spec=pltpu.PrefetchScalarGridSpec(
            num_scalar_prefetch=0,
            grid=(bp // tb,),
            in_specs=[
                pl.BlockSpec((tb, HW), lambda i: (i, 0)),              # image rows
                pl.BlockSpec(memory_space=pltpu.MemorySpace.SMEM),     # conv weights
                pl.BlockSpec(memory_space=pltpu.MemorySpace.SMEM),     # conv bias
                pl.BlockSpec((EMB, FEAT), lambda i: (0, 0)),           # fc weight (bf16)
                pl.BlockSpec((1, EMB), lambda i: (0, 0)),              # fc bias
            ],
            out_specs=pl.BlockSpec((tb, EMB), lambda i: (i, 0)),
        ),
        compiler_params=pltpu.CompilerParams(
            dimension_semantics=("parallel",)),
        cost_estimate=pl.CostEstimate(
            flops=flops, transcendentals=0, bytes_accessed=bytes_accessed),
    )(x_flat, conv_w_flat, conv_b_flat, fc_w_bf16, fc_b_2d)
    return out[:B]


# ----------------------------------------------------------------------------
# Pure-JAX reference (same bf16 operand rounding for the FC matmul)
# ----------------------------------------------------------------------------

def reference_forward(x_nchw, conv_w, conv_b, fc_w, fc_b):
    B = x_nchw.shape[0]
    x = x_nchw.reshape(B, H, W)
    xp = jnp.pad(x, ((0, 0), (1, 1), (1, 1)))
    w = conv_w[:, 0]                                          # [COUT, K, K]
    conv = jnp.zeros((B, COUT, H, W), jnp.float32)
    for kh in range(K):
        for kw in range(K):
            conv = conv + (xp[:, None, kh:kh + H, kw:kw + W]
                           * w[None, :, kh, kw, None, None])
    act = jnp.maximum(conv + conv_b[None, :, None, None], 0.0)
    feat = act.reshape(B, FEAT).astype(jnp.bfloat16)          # NCHW flatten (c,h,w)
    out = jnp.dot(feat, fc_w.astype(jnp.bfloat16).T,
                  preferred_element_type=jnp.float32)
    return out + fc_b[None, :]


if __name__ == "__main__":
    key = jax.random.PRNGKey(0)
    k_in, k_par = jax.random.split(key)
    # Country drawings: batch=2, 1 channel, 16x16 (NCHW like the PyTorch module).
    x = jax.random.normal(k_in, (2, CIN, H, W), jnp.float32)
    params = init_params(k_par)

    emb = triplet_forward(x, *params)
    emb = jax.block_until_ready(emb)

    ref = reference_forward(x, *params)
    assert emb.shape == (2, EMB), emb.shape
    assert jnp.allclose(emb, ref, atol=1e-2, rtol=1e-2), "mismatch vs reference"

    # TODO(synk): load_reference / rank_countries are host-side bookkeeping
    # (dict of reference embeddings, numpy softmax/argsort) and not part of forward().
    print("KERNEL_OK")
</pallas_src>

<mosaic_0001>
module attributes {stable_mosaic.version = 11 : i64} {
  func.func @_fused_embed_kernel(%arg0: i32, %arg1: memref<16x256xf32, #tpu.memory_space<vmem>>, %arg2: memref<72xf32, #tpu.memory_space<smem>>, %arg3: memref<8xf32, #tpu.memory_space<smem>>, %arg4: memref<32x2048xbf16, #tpu.memory_space<vmem>>, %arg5: memref<1x32xf32, #tpu.memory_space<vmem>>, %arg6: memref<16x32xf32, #tpu.memory_space<vmem>>) attributes {dimension_semantics = [#tpu.dimension_semantics<parallel>], iteration_bounds = array<i64: 1>, scalar_prefetch = 0 : i64, scratch_operands = 0 : i64, tpu.core_type = #tpu.core_type<tc>, window_params = [{transform_indices = @transform_0, window_bounds = array<i64: 16, 256>}, {transform_indices = @transform_1, window_bounds = array<i64: 72>}, {transform_indices = @transform_2, window_bounds = array<i64: 8>}, {pipeline_mode = #tpu.pipeline_mode<synchronous>, transform_indices = @transform_3, window_bounds = array<i64: 32, 2048>}, {pipeline_mode = #tpu.pipeline_mode<synchronous>, transform_indices = @transform_4, window_bounds = array<i64: 1, 32>}, {transform_indices = @transform_5, window_bounds = array<i64: 16, 32>}]} {
    %0 = tpu.iota {dimensions = array<i32: 1>} : vector<16x256xi32>
    %c4_i32 = arith.constant 4 : i32
    %1 = vector.broadcast %c4_i32 : i32 to vector<16x256xi32>
    %2 = arith.shrsi %0, %1 : vector<16x256xi32>
    %c15_i32 = arith.constant 15 : i32
    %3 = vector.broadcast %c15_i32 : i32 to vector<16x256xi32>
    %4 = arith.andi %0, %3 : vector<16x256xi32>
    %c1_i32 = arith.constant 1 : i32
    %5 = vector.broadcast %c1_i32 : i32 to vector<16x256xi32>
    %6 = arith.cmpi sge, %2, %5 : vector<16x256xi32>
    %c15_i32_0 = arith.constant 15 : i32
    %7 = vector.broadcast %c15_i32_0 : i32 to vector<16x256xi32>
    %8 = arith.cmpi slt, %2, %7 : vector<16x256xi32>
    %c1_i32_1 = arith.constant 1 : i32
    %9 = vector.broadcast %c1_i32_1 : i32 to vector<16x256xi32>
    %10 = arith.cmpi sge, %4, %9 : vector<16x256xi32>
    %c15_i32_2 = arith.constant 15 : i32
    %11 = vector.broadcast %c15_i32_2 : i32 to vector<16x256xi32>
    %12 = arith.cmpi slt, %4, %11 : vector<16x256xi32>
    %c0_i32 = arith.constant 0 : i32
    %c16_i32 = arith.constant 16 : i32
    %13 = arith.muli %c0_i32, %c16_i32 : i32
    %14 = tpu.assume_multiple %13, 16 : i32
    %15 = arith.index_cast %14 : i32 to index
    %c0 = arith.constant 0 : index
    %16 = vector.load %arg1[%15, %c0] : memref<16x256xf32, #tpu.memory_space<vmem>>, vector<16x256xf32>
    %c17_i32 = arith.constant 17 : i32
    %17 = tpu.dynamic_rotate %16 by %c17_i32 dim 1 : vector<16x256xf32>, i32 -> vector<16x256xf32>
    %18 = arith.andi %6, %10 : vector<16x256xi1>
    %cst = arith.constant 0.000000e+00 : f32
    %19 = vector.broadcast %cst : f32 to vector<16x256xf32>
    %20 = arith.select %18, %17, %19 : vector<16x256xi1>, vector<16x256xf32>
    %c16_i32_3 = arith.constant 16 : i32
    %21 = tpu.dynamic_rotate %16 by %c16_i32_3 dim 1 : vector<16x256xf32>, i32 -> vector<16x256xf32>
    %cst_4 = arith.constant 0.000000e+00 : f32
    %22 = vector.broadcast %cst_4 : f32 to vector<16x256xf32>
    %23 = arith.select %6, %21, %22 : vector<16x256xi1>, vector<16x256xf32>
    %c15_i32_5 = arith.constant 15 : i32
    %24 = tpu.dynamic_rotate %16 by %c15_i32_5 dim 1 : vector<16x256xf32>, i32 -> vector<16x256xf32>
    %25 = arith.andi %6, %12 : vector<16x256xi1>
    %cst_6 = arith.constant 0.000000e+00 : f32
    %26 = vector.broadcast %cst_6 : f32 to vector<16x256xf32>
    %27 = arith.select %25, %24, %26 : vector<16x256xi1>, vector<16x256xf32>
    %c1_i32_7 = arith.constant 1 : i32
    %28 = tpu.dynamic_rotate %16 by %c1_i32_7 dim 1 : vector<16x256xf32>, i32 -> vector<16x256xf32>
    %cst_8 = arith.constant 0.000000e+00 : f32
    %29 = vector.broadcast %cst_8 : f32 to vector<16x256xf32>
    %30 = arith.select %10, %28, %29 : vector<16x256xi1>, vector<16x256xf32>
    %c255_i32 = arith.constant 255 : i32
    %31 = tpu.dynamic_rotate %16 by %c255_i32 dim 1 : vector<16x256xf32>, i32 -> vector<16x256xf32>
    %cst_9 = arith.constant 0.000000e+00 : f32
    %32 = vector.broadcast %cst_9 : f32 to vector<16x256xf32>
    %33 = arith.select %12, %31, %32 : vector<16x256xi1>, vector<16x256xf32>
    %c241_i32 = arith.constant 241 : i32
    %34 = tpu.dynamic_rotate %16 by %c241_i32 dim 1 : vector<16x256xf32>, i32 -> vector<16x256xf32>
    %35 = arith.andi %8, %10 : vector<16x256xi1>
    %cst_10 = arith.constant 0.000000e+00 : f32
    %36 = vector.broadcast %cst_10 : f32 to vector<16x256xf32>
    %37 = arith.select %35, %34, %36 : vector<16x256xi1>, vector<16x256xf32>
    %c240_i32 = arith.constant 240 : i32
    %38 = tpu.dynamic_rotate %16 by %c240_i32 dim 1 : vector<16x256xf32>, i32 -> vector<16x256xf32>
    %cst_11 = arith.constant 0.000000e+00 : f32
    %39 = vector.broadcast %cst_11 : f32 to vector<16x256xf32>
    %40 = arith.select %8, %38, %39 : vector<16x256xi1>, vector<16x256xf32>
    %c239_i32 = arith.constant 239 : i32
    %41 = tpu.dynamic_rotate %16 by %c239_i32 dim 1 : vector<16x256xf32>, i32 -> vector<16x256xf32>
    %42 = arith.andi %8, %12 : vector<16x256xi1>
    %cst_12 = arith.constant 0.000000e+00 : f32
    %43 = vector.broadcast %cst_12 : f32 to vector<16x256xf32>
    %44 = arith.select %42, %41, %43 : vector<16x256xi1>, vector<16x256xf32>
    %cst_13 = arith.constant 0.000000e+00 : f32
    %45 = vector.broadcast %cst_13 : f32 to vector<16x32xf32>
    %c0_14 = arith.constant 0 : index
    %46 = memref.load %arg2[%c0_14] : memref<72xf32, #tpu.memory_space<smem>>
    %47 = vector.broadcast %46 : f32 to vector<16x256xf32>
    %48 = arith.mulf %20, %47 : vector<16x256xf32>
    %c8 = arith.constant 8 : index
    %49 = memref.load %arg2[%c8] : memref<72xf32, #tpu.memory_space<smem>>
    %50 = vector.broadcast %49 : f32 to vector<16x256xf32>
    %51 = arith.mulf %23, %50 : vector<16x256xf32>
    %52 = arith.addf %48, %51 : vector<16x256xf32>
    %c16 = arith.constant 16 : index
    %53 = memref.load %arg2[%c16] : memref<72xf32, #tpu.memory_space<smem>>
    %54 = vector.broadcast %53 : f32 to vector<16x256xf32>
    %55 = arith.mulf %27, %54 : vector<16x256xf32>
    %56 = arith.addf %52, %55 : vector<16x256xf32>
    %c24 = arith.constant 24 : index
    %57 = memref.load %arg2[%c24] : memref<72xf32, #tpu.memory_space<smem>>
    %58 = vector.broadcast %57 : f32 to vector<16x256xf32>
    %59 = arith.mulf %30, %58 : vector<16x256xf32>
    %60 = arith.addf %56, %59 : vector<16x256xf32>
    %c32 = arith.constant 32 : index
    %61 = memref.load %arg2[%c32] : memref<72xf32, #tpu.memory_space<smem>>
    %62 = vector.broadcast %61 : f32 to vector<16x256xf32>
    %63 = arith.mulf %16, %62 : vector<16x256xf32>
    %64 = arith.addf %60, %63 : vector<16x256xf32>
    %c40 = arith.constant 40 : index
    %65 = memref.load %arg2[%c40] : memref<72xf32, #tpu.memory_space<smem>>
    %66 = vector.broadcast %65 : f32 to vector<16x256xf32>
    %67 = arith.mulf %33, %66 : vector<16x256xf32>
    %68 = arith.addf %64, %67 : vector<16x256xf32>
    %c48 = arith.constant 48 : index
    %69 = memref.load %arg2[%c48] : memref<72xf32, #tpu.memory_space<smem>>
    %70 = vector.broadcast %69 : f32 to vector<16x256xf32>
    %71 = arith.mulf %37, %70 : vector<16x256xf32>
    %72 = arith.addf %68, %71 : vector<16x256xf32>
    %c56 = arith.constant 56 : index
    %73 = memref.load %arg2[%c56] : memref<72xf32, #tpu.memory_space<smem>>
    %74 = vector.broadcast %73 : f32 to vector<16x256xf32>
    %75 = arith.mulf %40, %74 : vector<16x256xf32>
    %76 = arith.addf %72, %75 : vector<16x256xf32>
    %c64 = arith.constant 64 : index
    %77 = memref.load %arg2[%c64] : memref<72xf32, #tpu.memory_space<smem>>
    %78 = vector.broadcast %77 : f32 to vector<16x256xf32>
    %79 = arith.mulf %44, %78 : vector<16x256xf32>
    %80 = arith.addf %76, %79 : vector<16x256xf32>
    %c0_15 = arith.constant 0 : index
    %81 = memref.load %arg3[%c0_15] : memref<8xf32, #tpu.memory_space<smem>>
    %82 = vector.broadcast %81 : f32 to vector<16x256xf32>
    %83 = arith.addf %80, %82 : vector<16x256xf32>
    %cst_16 = arith.constant 0.000000e+00 : f32
    %84 = vector.broadcast %cst_16 : f32 to vector<16x256xf32>
    %85 = arith.maximumf %83, %84 : vector<16x256xf32>
    %86 = arith.truncf %85 : vector<16x256xf32> to vector<16x256xbf16>
    %c0_17 = arith.constant 0 : index
    %c0_18 = arith.constant 0 : index
    %87 = vector.load %arg4[%c0_17, %c0_18] : memref<32x2048xbf16, #tpu.memory_space<vmem>>, vector<32x256xbf16>
    %cst_19 = arith.constant dense<0.000000e+00> : vector<16x32xf32>
    %88 = tpu.matmul %86, %87, %cst_19 {dimension_numbers = #tpu.dot_dimension_numbers<[1], [1], [0], [0], [0, 0, 1, 0], [], []>} : vector<16x256xbf16>, vector<32x256xbf16>, vector<16x32xf32> -> vector<16x32xf32>
    %89 = arith.addf %45, %88 : vector<16x32xf32>
    %c1 = arith.constant 1 : index
    %90 = memref.load %arg2[%c1] : memref<72xf32, #tpu.memory_space<smem>>
    %91 = vector.broadcast %90 : f32 to vector<16x256xf32>
    %92 = arith.mulf %20, %91 : vector<16x256xf32>
    %c9 = arith.constant 9 : index
    %93 = memref.load %arg2[%c9] : memref<72xf32, #tpu.memory_space<smem>>
    %94 = vector.broadcast %93 : f32 to vector<16x256xf32>
    %95 = arith.mulf %23, %94 : vector<16x256xf32>
    %96 = arith.addf %92, %95 : vector<16x256xf32>
    %c17 = arith.constant 17 : index
    %97 = memref.load %arg2[%c17] : memref<72xf32, #tpu.memory_space<smem>>
    %98 = vector.broadcast %97 : f32 to vector<16x256xf32>
    %99 = arith.mulf %27, %98 : vector<16x256xf32>
    %100 = arith.addf %96, %99 : vector<16x256xf32>
    %c25 = arith.constant 25 : index
    %101 = memref.load %arg2[%c25] : memref<72xf32, #tpu.memory_space<smem>>
    %102 = vector.broadcast %101 : f32 to vector<16x256xf32>
    %103 = arith.mulf %30, %102 : vector<16x256xf32>
    %104 = arith.addf %100, %103 : vector<16x256xf32>
    %c33 = arith.constant 33 : index
    %105 = memref.load %arg2[%c33] : memref<72xf32, #tpu.memory_space<smem>>
    %106 = vector.broadcast %105 : f32 to vector<16x256xf32>
    %107 = arith.mulf %16, %106 : vector<16x256xf32>
    %108 = arith.addf %104, %107 : vector<16x256xf32>
    %c41 = arith.constant 41 : index
    %109 = memref.load %arg2[%c41] : memref<72xf32, #tpu.memory_space<smem>>
    %110 = vector.broadcast %109 : f32 to vector<16x256xf32>
    %111 = arith.mulf %33, %110 : vector<16x256xf32>
    %112 = arith.addf %108, %111 : vector<16x256xf32>
    %c49 = arith.constant 49 : index
    %113 = memref.load %arg2[%c49] : memref<72xf32, #tpu.memory_space<smem>>
    %114 = vector.broadcast %113 : f32 to vector<16x256xf32>
    %115 = arith.mulf %37, %114 : vector<16x256xf32>
    %116 = arith.addf %112, %115 : vector<16x256xf32>
    %c57 = arith.constant 57 : index
    %117 = memref.load %arg2[%c57] : memref<72xf32, #tpu.memory_space<smem>>
    %118 = vector.broadcast %117 : f32 to vector<16x256xf32>
    %119 = arith.mulf %40, %118 : vector<16x256xf32>
    %120 = arith.addf %116, %119 : vector<16x256xf32>
    %c65 = arith.constant 65 : index
    %121 = memref.load %arg2[%c65] : memref<72xf32, #tpu.memory_space<smem>>
    %122 = vector.broadcast %121 : f32 to vector<16x256xf32>
    %123 = arith.mulf %44, %122 : vector<16x256xf32>
    %124 = arith.addf %120, %123 : vector<16x256xf32>
    %c1_20 = arith.constant 1 : index
    %125 = memref.load %arg3[%c1_20] : memref<8xf32, #tpu.memory_space<smem>>
    %126 = vector.broadcast %125 : f32 to vector<16x256xf32>
    %127 = arith.addf %124, %126 : vector<16x256xf32>
    %cst_21 = arith.constant 0.000000e+00 : f32
    %128 = vector.broadcast %cst_21 : f32 to vector<16x256xf32>
    %129 = arith.maximumf %127, %128 : vector<16x256xf32>
    %130 = arith.truncf %129 : vector<16x256xf32> to vector<16x256xbf16>
    %c0_22 = arith.constant 0 : index
    %c256 = arith.constant 256 : index
    %131 = vector.load %arg4[%c0_22, %c256] : memref<32x2048xbf16, #tpu.memory_space<vmem>>, vector<32x256xbf16>
    %cst_23 = arith.constant dense<0.000000e+00> : vector<16x32xf32>
    %132 = tpu.matmul %130, %131, %cst_23 {dimension_numbers = #tpu.dot_dimension_numbers<[1], [1], [0], [0], [0, 0, 1, 0], [], []>} : vector<16x256xbf16>, vector<32x256xbf16>, vector<16x32xf32> -> vector<16x32xf32>
    %133 = arith.addf %89, %132 : vector<16x32xf32>
    %c2 = arith.constant 2 : index
    %134 = memref.load %arg2[%c2] : memref<72xf32, #tpu.memory_space<smem>>
    %135 = vector.broadcast %134 : f32 to vector<16x256xf32>
    %136 = arith.mulf %20, %135 : vector<16x256xf32>
    %c10 = arith.constant 10 : index
    %137 = memref.load %arg2[%c10] : memref<72xf32, #tpu.memory_space<smem>>
    %138 = vector.broadcast %137 : f32 to vector<16x256xf32>
    %139 = arith.mulf %23, %138 : vector<16x256xf32>
    %140 = arith.addf %136, %139 : vector<16x256xf32>
    %c18 = arith.constant 18 : index
    %141 = memref.load %arg2[%c18] : memref<72xf32, #tpu.memory_space<smem>>
    %142 = vector.broadcast %141 : f32 to vector<16x256xf32>
    %143 = arith.mulf %27, %142 : vector<16x256xf32>
    %144 = arith.addf %140, %143 : vector<16x256xf32>
    %c26 = arith.constant 26 : index
    %145 = memref.load %arg2[%c26] : memref<72xf32, #tpu.memory_space<smem>>
    %146 = vector.broadcast %145 : f32 to vector<16x256xf32>
    %147 = arith.mulf %30, %146 : vector<16x256xf32>
    %148 = arith.addf %144, %147 : vector<16x256xf32>
    %c34 = arith.constant 34 : index
    %149 = memref.load %arg2[%c34] : memref<72xf32, #tpu.memory_space<smem>>
    %150 = vector.broadcast %149 : f32 to vector<16x256xf32>
    %151 = arith.mulf %16, %150 : vector<16x256xf32>
    %152 = arith.addf %148, %151 : vector<16x256xf32>
    %c42 = arith.constant 42 : index
    %153 = memref.load %arg2[%c42] : memref<72xf32, #tpu.memory_space<smem>>
    %154 = vector.broadcast %153 : f32 to vector<16x256xf32>
    %155 = arith.mulf %33, %154 : vector<16x256xf32>
    %156 = arith.addf %152, %155 : vector<16x256xf32>
    %c50 = arith.constant 50 : index
    %157 = memref.load %arg2[%c50] : memref<72xf32, #tpu.memory_space<smem>>
    %158 = vector.broadcast %157 : f32 to vector<16x256xf32>
    %159 = arith.mulf %37, %158 : vector<16x256xf32>
    %160 = arith.addf %156, %159 : vector<16x256xf32>
    %c58 = arith.constant 58 : index
    %161 = memref.load %arg2[%c58] : memref<72xf32, #tpu.memory_space<smem>>
    %162 = vector.broadcast %161 : f32 to vector<16x256xf32>
    %163 = arith.mulf %40, %162 : vector<16x256xf32>
    %164 = arith.addf %160, %163 : vector<16x256xf32>
    %c66 = arith.constant 66 : index
    %165 = memref.load %arg2[%c66] : memref<72xf32, #tpu.memory_space<smem>>
    %166 = vector.broadcast %165 : f32 to vector<16x256xf32>
    %167 = arith.mulf %44, %166 : vector<16x256xf32>
    %168 = arith.addf %164, %167 : vector<16x256xf32>
    %c2_24 = arith.constant 2 : index
    %169 = memref.load %arg3[%c2_24] : memref<8xf32, #tpu.memory_space<smem>>
    %170 = vector.broadcast %169 : f32 to vector<16x256xf32>
    %171 = arith.addf %168, %170 : vector<16x256xf32>
    %cst_25 = arith.constant 0.000000e+00 : f32
    %172 = vector.broadcast %cst_25 : f32 to vector<16x256xf32>
    %173 = arith.maximumf %171, %172 : vector<16x256xf32>
    %174 = arith.truncf %173 : vector<16x256xf32> to vector<16x256xbf16>
    %c0_26 = arith.constant 0 : index
    %c512 = arith.constant 512 : index
    %175 = vector.load %arg4[%c0_26, %c512] : memref<32x2048xbf16, #tpu.memory_space<vmem>>, vector<32x256xbf16>
    %cst_27 = arith.constant dense<0.000000e+00> : vector<16x32xf32>
    %176 = tpu.matmul %174, %175, %cst_27 {dimension_numbers = #tpu.dot_dimension_numbers<[1], [1], [0], [0], [0, 0, 1, 0], [], []>} : vector<16x256xbf16>, vector<32x256xbf16>, vector<16x32xf32> -> vector<16x32xf32>
    %177 = arith.addf %133, %176 : vector<16x32xf32>
    %c3 = arith.constant 3 : index
    %178 = memref.load %arg2[%c3] : memref<72xf32, #tpu.memory_space<smem>>
    %179 = vector.broadcast %178 : f32 to vector<16x256xf32>
    %180 = arith.mulf %20, %179 : vector<16x256xf32>
    %c11 = arith.constant 11 : index
    %181 = memref.load %arg2[%c11] : memref<72xf32, #tpu.memory_space<smem>>
    %182 = vector.broadcast %181 : f32 to vector<16x256xf32>
    %183 = arith.mulf %23, %182 : vector<16x256xf32>
    %184 = arith.addf %180, %183 : vector<16x256xf32>
    %c19 = arith.constant 19 : index
    %185 = memref.load %arg2[%c19] : memref<72xf32, #tpu.memory_space<smem>>
    %186 = vector.broadcast %185 : f32 to vector<16x256xf32>
    %187 = arith.mulf %27, %186 : vector<16x256xf32>
    %188 = arith.addf %184, %187 : vector<16x256xf32>
    %c27 = arith.constant 27 : index
    %189 = memref.load %arg2[%c27] : memref<72xf32, #tpu.memory_space<smem>>
    %190 = vector.broadcast %189 : f32 to vector<16x256xf32>
    %191 = arith.mulf %30, %190 : vector<16x256xf32>
    %192 = arith.addf %188, %191 : vector<16x256xf32>
    %c35 = arith.constant 35 : index
    %193 = memref.load %arg2[%c35] : memref<72xf32, #tpu.memory_space<smem>>
    %194 = vector.broadcast %193 : f32 to vector<16x256xf32>
    %195 = arith.mulf %16, %194 : vector<16x256xf32>
    %196 = arith.addf %192, %195 : vector<16x256xf32>
    %c43 = arith.constant 43 : index
    %197 = memref.load %arg2[%c43] : memref<72xf32, #tpu.memory_space<smem>>
    %198 = vector.broadcast %197 : f32 to vector<16x256xf32>
    %199 = arith.mulf %33, %198 : vector<16x256xf32>
    %200 = arith.addf %196, %199 : vector<16x256xf32>
    %c51 = arith.constant 51 : index
    %201 = memref.load %arg2[%c51] : memref<72xf32, #tpu.memory_space<smem>>
    %202 = vector.broadcast %201 : f32 to vector<16x256xf32>
    %203 = arith.mulf %37, %202 : vector<16x256xf32>
    %204 = arith.addf %200, %203 : vector<16x256xf32>
    %c59 = arith.constant 59 : index
    %205 = memref.load %arg2[%c59] : memref<72xf32, #tpu.memory_space<smem>>
    %206 = vector.broadcast %205 : f32 to vector<16x256xf32>
    %207 = arith.mulf %40, %206 : vector<16x256xf32>
    %208 = arith.addf %204, %207 : vector<16x256xf32>
    %c67 = arith.constant 67 : index
    %209 = memref.load %arg2[%c67] : memref<72xf32, #tpu.memory_space<smem>>
    %210 = vector.broadcast %209 : f32 to vector<16x256xf32>
    %211 = arith.mulf %44, %210 : vector<16x256xf32>
    %212 = arith.addf %208, %211 : vector<16x256xf32>
    %c3_28 = arith.constant 3 : index
    %213 = memref.load %arg3[%c3_28] : memref<8xf32, #tpu.memory_space<smem>>
    %214 = vector.broadcast %213 : f32 to vector<16x256xf32>
    %215 = arith.addf %212, %214 : vector<16x256xf32>
    %cst_29 = arith.constant 0.000000e+00 : f32
    %216 = vector.broadcast %cst_29 : f32 to vector<16x256xf32>
    %217 = arith.maximumf %215, %216 : vector<16x256xf32>
    %218 = arith.truncf %217 : vector<16x256xf32> to vector<16x256xbf16>
    %c0_30 = arith.constant 0 : index
    %c768 = arith.constant 768 : index
    %219 = vector.load %arg4[%c0_30, %c768] : memref<32x2048xbf16, #tpu.memory_space<vmem>>, vector<32x256xbf16>
    %cst_31 = arith.constant dense<0.000000e+00> : vector<16x32xf32>
    %220 = tpu.matmul %218, %219, %cst_31 {dimension_numbers = #tpu.dot_dimension_numbers<[1], [1], [0], [0], [0, 0, 1, 0], [], []>} : vector<16x256xbf16>, vector<32x256xbf16>, vector<16x32xf32> -> vector<16x32xf32>
    %221 = arith.addf %177, %220 : vector<16x32xf32>
    %c4 = arith.constant 4 : index
    %222 = memref.load %arg2[%c4] : memref<72xf32, #tpu.memory_space<smem>>
    %223 = vector.broadcast %222 : f32 to vector<16x256xf32>
    %224 = arith.mulf %20, %223 : vector<16x256xf32>
    %c12 = arith.constant 12 : index
    %225 = memref.load %arg2[%c12] : memref<72xf32, #tpu.memory_space<smem>>
    %226 = vector.broadcast %225 : f32 to vector<16x256xf32>
    %227 = arith.mulf %23, %226 : vector<16x256xf32>
    %228 = arith.addf %224, %227 : vector<16x256xf32>
    %c20 = arith.constant 20 : index
    %229 = memref.load %arg2[%c20] : memref<72xf32, #tpu.memory_space<smem>>
    %230 = vector.broadcast %229 : f32 to vector<16x256xf32>
    %231 = arith.mulf %27, %230 : vector<16x256xf32>
    %232 = arith.addf %228, %231 : vector<16x256xf32>
    %c28 = arith.constant 28 : index
    %233 = memref.load %arg2[%c28] : memref<72xf32, #tpu.memory_space<smem>>
    %234 = vector.broadcast %233 : f32 to vector<16x256xf32>
    %235 = arith.mulf %30, %234 : vector<16x256xf32>
    %236 = arith.addf %232, %235 : vector<16x256xf32>
    %c36 = arith.constant 36 : index
    %237 = memref.load %arg2[%c36] : memref<72xf32, #tpu.memory_space<smem>>
    %238 = vector.broadcast %237 : f32 to vector<16x256xf32>
    %239 = arith.mulf %16, %238 : vector<16x256xf32>
    %240 = arith.addf %236, %239 : vector<16x256xf32>
    %c44 = arith.constant 44 : index
    %241 = memref.load %arg2[%c44] : memref<72xf32, #tpu.memory_space<smem>>
    %242 = vector.broadcast %241 : f32 to vector<16x256xf32>
    %243 = arith.mulf %33, %242 : vector<16x256xf32>
    %244 = arith.addf %240, %243 : vector<16x256xf32>
    %c52 = arith.constant 52 : index
    %245 = memref.load %arg2[%c52] : memref<72xf32, #tpu.memory_space<smem>>
    %246 = vector.broadcast %245 : f32 to vector<16x256xf32>
    %247 = arith.mulf %37, %246 : vector<16x256xf32>
    %248 = arith.addf %244, %247 : vector<16x256xf32>
    %c60 = arith.constant 60 : index
    %249 = memref.load %arg2[%c60] : memref<72xf32, #tpu.memory_space<smem>>
    %250 = vector.broadcast %249 : f32 to vector<16x256xf32>
    %251 = arith.mulf %40, %250 : vector<16x256xf32>
    %252 = arith.addf %248, %251 : vector<16x256xf32>
    %c68 = arith.constant 68 : index
    %253 = memref.load %arg2[%c68] : memref<72xf32, #tpu.memory_space<smem>>
    %254 = vector.broadcast %253 : f32 to vector<16x256xf32>
    %255 = arith.mulf %44, %254 : vector<16x256xf32>
    %256 = arith.addf %252, %255 : vector<16x256xf32>
    %c4_32 = arith.constant 4 : index
    %257 = memref.load %arg3[%c4_32] : memref<8xf32, #tpu.memory_space<smem>>
    %258 = vector.broadcast %257 : f32 to vector<16x256xf32>
    %259 = arith.addf %256, %258 : vector<16x256xf32>
    %cst_33 = arith.constant 0.000000e+00 : f32
    %260 = vector.broadcast %cst_33 : f32 to vector<16x256xf32>
    %261 = arith.maximumf %259, %260 : vector<16x256xf32>
    %262 = arith.truncf %261 : vector<16x256xf32> to vector<16x256xbf16>
    %c0_34 = arith.constant 0 : index
    %c1024 = arith.constant 1024 : index
    %263 = vector.load %arg4[%c0_34, %c1024] : memref<32x2048xbf16, #tpu.memory_space<vmem>>, vector<32x256xbf16>
    %cst_35 = arith.constant dense<0.000000e+00> : vector<16x32xf32>
    %264 = tpu.matmul %262, %263, %cst_35 {dimension_numbers = #tpu.dot_dimension_numbers<[1], [1], [0], [0], [0, 0, 1, 0], [], []>} : vector<16x256xbf16>, vector<32x256xbf16>, vector<16x32xf32> -> vector<16x32xf32>
    %265 = arith.addf %221, %264 : vector<16x32xf32>
    %c5 = arith.constant 5 : index
    %266 = memref.load %arg2[%c5] : memref<72xf32, #tpu.memory_space<smem>>
    %267 = vector.broadcast %266 : f32 to vector<16x256xf32>
    %268 = arith.mulf %20, %267 : vector<16x256xf32>
    %c13 = arith.constant 13 : index
    %269 = memref.load %arg2[%c13] : memref<72xf32, #tpu.memory_space<smem>>
    %270 = vector.broadcast %269 : f32 to vector<16x256xf32>
    %271 = arith.mulf %23, %270 : vector<16x256xf32>
    %272 = arith.addf %268, %271 : vector<16x256xf32>
    %c21 = arith.constant 21 : index
    %273 = memref.load %arg2[%c21] : memref<72xf32, #tpu.memory_space<smem>>
    %274 = vector.broadcast %273 : f32 to vector<16x256xf32>
    %275 = arith.mulf %27, %274 : vector<16x256xf32>
    %276 = arith.addf %272, %275 : vector<16x256xf32>
    %c29 = arith.constant 29 : index
    %277 = memref.load %arg2[%c29] : memref<72xf32, #tpu.memory_space<smem>>
    %278 = vector.broadcast %277 : f32 to vector<16x256xf32>
    %279 = arith.mulf %30, %278 : vector<16x256xf32>
    %280 = arith.addf %276, %279 : vector<16x256xf32>
    %c37 = arith.constant 37 : index
    %281 = memref.load %arg2[%c37] : memref<72xf32, #tpu.memory_space<smem>>
    %282 = vector.broadcast %281 : f32 to vector<16x256xf32>
    %283 = arith.mulf %16, %282 : vector<16x256xf32>
    %284 = arith.addf %280, %283 : vector<16x256xf32>
    %c45 = arith.constant 45 : index
    %285 = memref.load %arg2[%c45] : memref<72xf32, #tpu.memory_space<smem>>
    %286 = vector.broadcast %285 : f32 to vector<16x256xf32>
    %287 = arith.mulf %33, %286 : vector<16x256xf32>
    %288 = arith.addf %284, %287 : vector<16x256xf32>
    %c53 = arith.constant 53 : index
    %289 = memref.load %arg2[%c53] : memref<72xf32, #tpu.memory_space<smem>>
    %290 = vector.broadcast %289 : f32 to vector<16x256xf32>
    %291 = arith.mulf %37, %290 : vector<16x256xf32>
    %292 = arith.addf %288, %291 : vector<16x256xf32>
    %c61 = arith.constant 61 : index
    %293 = memref.load %arg2[%c61] : memref<72xf32, #tpu.memory_space<smem>>
    %294 = vector.broadcast %293 : f32 to vector<16x256xf32>
    %295 = arith.mulf %40, %294 : vector<16x256xf32>
    %296 = arith.addf %292, %295 : vector<16x256xf32>
    %c69 = arith.constant 69 : index
    %297 = memref.load %arg2[%c69] : memref<72xf32, #tpu.memory_space<smem>>
    %298 = vector.broadcast %297 : f32 to vector<16x256xf32>
    %299 = arith.mulf %44, %298 : vector<16x256xf32>
    %300 = arith.addf %296, %299 : vector<16x256xf32>
    %c5_36 = arith.constant 5 : index
    %301 = memref.load %arg3[%c5_36] : memref<8xf32, #tpu.memory_space<smem>>
    %302 = vector.broadcast %301 : f32 to vector<16x256xf32>
    %303 = arith.addf %300, %302 : vector<16x256xf32>
    %cst_37 = arith.constant 0.000000e+00 : f32
    %304 = vector.broadcast %cst_37 : f32 to vector<16x256xf32>
    %305 = arith.maximumf %303, %304 : vector<16x256xf32>
    %306 = arith.truncf %305 : vector<16x256xf32> to vector<16x256xbf16>
    %c0_38 = arith.constant 0 : index
    %c1280 = arith.constant 1280 : index
    %307 = vector.load %arg4[%c0_38, %c1280] : memref<32x2048xbf16, #tpu.memory_space<vmem>>, vector<32x256xbf16>
    %cst_39 = arith.constant dense<0.000000e+00> : vector<16x32xf32>
    %308 = tpu.matmul %306, %307, %cst_39 {dimension_numbers = #tpu.dot_dimension_numbers<[1], [1], [0], [0], [0, 0, 1, 0], [], []>} : vector<16x256xbf16>, vector<32x256xbf16>, vector<16x32xf32> -> vector<16x32xf32>
    %309 = arith.addf %265, %308 : vector<16x32xf32>
    %c6 = arith.constant 6 : index
    %310 = memref.load %arg2[%c6] : memref<72xf32, #tpu.memory_space<smem>>
    %311 = vector.broadcast %310 : f32 to vector<16x256xf32>
    %312 = arith.mulf %20, %311 : vector<16x256xf32>
    %c14 = arith.constant 14 : index
    %313 = memref.load %arg2[%c14] : memref<72xf32, #tpu.memory_space<smem>>
    %314 = vector.broadcast %313 : f32 to vector<16x256xf32>
    %315 = arith.mulf %23, %314 : vector<16x256xf32>
    %316 = arith.addf %312, %315 : vector<16x256xf32>
    %c22 = arith.constant 22 : index
    %317 = memref.load %arg2[%c22] : memref<72xf32, #tpu.memory_space<smem>>
    %318 = vector.broadcast %317 : f32 to vector<16x256xf32>
    %319 = arith.mulf %27, %318 : vector<16x256xf32>
    %320 = arith.addf %316, %319 : vector<16x256xf32>
    %c30 = arith.constant 30 : index
    %321 = memref.load %arg2[%c30] : memref<72xf32, #tpu.memory_space<smem>>
    %322 = vector.broadcast %321 : f32 to vector<16x256xf32>
    %323 = arith.mulf %30, %322 : vector<16x256xf32>
    %324 = arith.addf %320, %323 : vector<16x256xf32>
    %c38 = arith.constant 38 : index
    %325 = memref.load %arg2[%c38] : memref<72xf32, #tpu.memory_space<smem>>
    %326 = vector.broadcast %325 : f32 to vector<16x256xf32>
    %327 = arith.mulf %16, %326 : vector<16x256xf32>
    %328 = arith.addf %324, %327 : vector<16x256xf32>
    %c46 = arith.constant 46 : index
    %329 = memref.load %arg2[%c46] : memref<72xf32, #tpu.memory_space<smem>>
    %330 = vector.broadcast %329 : f32 to vector<16x256xf32>
    %331 = arith.mulf %33, %330 : vector<16x256xf32>
    %332 = arith.addf %328, %331 : vector<16x256xf32>
    %c54 = arith.constant 54 : index
    %333 = memref.load %arg2[%c54] : memref<72xf32, #tpu.memory_space<smem>>
    %334 = vector.broadcast %333 : f32 to vector<16x256xf32>
    %335 = arith.mulf %37, %334 : vector<16x256xf32>
    %336 = arith.addf %332, %335 : vector<16x256xf32>
    %c62 = arith.constant 62 : index
    %337 = memref.load %arg2[%c62] : memref<72xf32, #tpu.memory_space<smem>>
    %338 = vector.broadcast %337 : f32 to vector<16x256xf32>
    %339 = arith.mulf %40, %338 : vector<16x256xf32>
    %340 = arith.addf %336, %339 : vector<16x256xf32>
    %c70 = arith.constant 70 : index
    %341 = memref.load %arg2[%c70] : memref<72xf32, #tpu.memory_space<smem>>
    %342 = vector.broadcast %341 : f32 to vector<16x256xf32>
    %343 = arith.mulf %44, %342 : vector<16x256xf32>
    %344 = arith.addf %340, %343 : vector<16x256xf32>
    %c6_40 = arith.constant 6 : index
    %345 = memref.load %arg3[%c6_40] : memref<8xf32, #tpu.memory_space<smem>>
    %346 = vector.broadcast %345 : f32 to vector<16x256xf32>
    %347 = arith.addf %344, %346 : vector<16x256xf32>
    %cst_41 = arith.constant 0.000000e+00 : f32
    %348 = vector.broadcast %cst_41 : f32 to vector<16x256xf32>
    %349 = arith.maximumf %347, %348 : vector<16x256xf32>
    %350 = arith.truncf %349 : vector<16x256xf32> to vector<16x256xbf16>
    %c0_42 = arith.constant 0 : index
    %c1536 = arith.constant 1536 : index
    %351 = vector.load %arg4[%c0_42, %c1536] : memref<32x2048xbf16, #tpu.memory_space<vmem>>, vector<32x256xbf16>
    %cst_43 = arith.constant dense<0.000000e+00> : vector<16x32xf32>
    %352 = tpu.matmul %350, %351, %cst_43 {dimension_numbers = #tpu.dot_dimension_numbers<[1], [1], [0], [0], [0, 0, 1, 0], [], []>} : vector<16x256xbf16>, vector<32x256xbf16>, vector<16x32xf32> -> vector<16x32xf32>
    %353 = arith.addf %309, %352 : vector<16x32xf32>
    %c7 = arith.constant 7 : index
    %354 = memref.load %arg2[%c7] : memref<72xf32, #tpu.memory_space<smem>>
    %355 = vector.broadcast %354 : f32 to vector<16x256xf32>
    %356 = arith.mulf %20, %355 : vector<16x256xf32>
    %c15 = arith.constant 15 : index
    %357 = memref.load %arg2[%c15] : memref<72xf32, #tpu.memory_space<smem>>
    %358 = vector.broadcast %357 : f32 to vector<16x256xf32>
    %359 = arith.mulf %23, %358 : vector<16x256xf32>
    %360 = arith.addf %356, %359 : vector<16x256xf32>
    %c23 = arith.constant 23 : index
    %361 = memref.load %arg2[%c23] : memref<72xf32, #tpu.memory_space<smem>>
    %362 = vector.broadcast %361 : f32 to vector<16x256xf32>
    %363 = arith.mulf %27, %362 : vector<16x256xf32>
    %364 = arith.addf %360, %363 : vector<16x256xf32>
    %c31 = arith.constant 31 : index
    %365 = memref.load %arg2[%c31] : memref<72xf32, #tpu.memory_space<smem>>
    %366 = vector.broadcast %365 : f32 to vector<16x256xf32>
    %367 = arith.mulf %30, %366 : vector<16x256xf32>
    %368 = arith.addf %364, %367 : vector<16x256xf32>
    %c39 = arith.constant 39 : index
    %369 = memref.load %arg2[%c39] : memref<72xf32, #tpu.memory_space<smem>>
    %370 = vector.broadcast %369 : f32 to vector<16x256xf32>
    %371 = arith.mulf %16, %370 : vector<16x256xf32>
    %372 = arith.addf %368, %371 : vector<16x256xf32>
    %c47 = arith.constant 47 : index
    %373 = memref.load %arg2[%c47] : memref<72xf32, #tpu.memory_space<smem>>
    %374 = vector.broadcast %373 : f32 to vector<16x256xf32>
    %375 = arith.mulf %33, %374 : vector<16x256xf32>
    %376 = arith.addf %372, %375 : vector<16x256xf32>
    %c55 = arith.constant 55 : index
    %377 = memref.load %arg2[%c55] : memref<72xf32, #tpu.memory_space<smem>>
    %378 = vector.broadcast %377 : f32 to vector<16x256xf32>
    %379 = arith.mulf %37, %378 : vector<16x256xf32>
    %380 = arith.addf %376, %379 : vector<16x256xf32>
    %c63 = arith.constant 63 : index
    %381 = memref.load %arg2[%c63] : memref<72xf32, #tpu.memory_space<smem>>
    %382 = vector.broadcast %381 : f32 to vector<16x256xf32>
    %383 = arith.mulf %40, %382 : vector<16x256xf32>
    %384 = arith.addf %380, %383 : vector<16x256xf32>
    %c71 = arith.constant 71 : index
    %385 = memref.load %arg2[%c71] : memref<72xf32, #tpu.memory_space<smem>>
    %386 = vector.broadcast %385 : f32 to vector<16x256xf32>
    %387 = arith.mulf %44, %386 : vector<16x256xf32>
    %388 = arith.addf %384, %387 : vector<16x256xf32>
    %c7_44 = arith.constant 7 : index
    %389 = memref.load %arg3[%c7_44] : memref<8xf32, #tpu.memory_space<smem>>
    %390 = vector.broadcast %389 : f32 to vector<16x256xf32>
    %391 = arith.addf %388, %390 : vector<16x256xf32>
    %cst_45 = arith.constant 0.000000e+00 : f32
    %392 = vector.broadcast %cst_45 : f32 to vector<16x256xf32>
    %393 = arith.maximumf %391, %392 : vector<16x256xf32>
    %394 = arith.truncf %393 : vector<16x256xf32> to vector<16x256xbf16>
    %c0_46 = arith.constant 0 : index
    %c1792 = arith.constant 1792 : index
    %395 = vector.load %arg4[%c0_46, %c1792] : memref<32x2048xbf16, #tpu.memory_space<vmem>>, vector<32x256xbf16>
    %cst_47 = arith.constant dense<0.000000e+00> : vector<16x32xf32>
    %396 = tpu.matmul %394, %395, %cst_47 {dimension_numbers = #tpu.dot_dimension_numbers<[1], [1], [0], [0], [0, 0, 1, 0], [], []>} : vector<16x256xbf16>, vector<32x256xbf16>, vector<16x32xf32> -> vector<16x32xf32>
    %397 = arith.addf %353, %396 : vector<16x32xf32>
    %c0_48 = arith.constant 0 : index
    %c0_49 = arith.constant 0 : index
    %398 = vector.load %arg5[%c0_48, %c0_49] : memref<1x32xf32, #tpu.memory_space<vmem>>, vector<1x32xf32>
    %399 = vector.broadcast %398 : vector<1x32xf32> to vector<16x32xf32>
    %400 = arith.addf %397, %399 : vector<16x32xf32>
    %401 = arith.index_cast %14 : i32 to index
    %c0_50 = arith.constant 0 : index
    %402 = vector.load %arg6[%401, %c0_50] : memref<16x32xf32, #tpu.memory_space<vmem>>, vector<16x32xf32>
    tpu.vector_store %arg6[%401, %c0_50], %400 {strides = array<i32>} : memref<16x32xf32, #tpu.memory_space<vmem>>, vector<16x32xf32>,
    %c1_i32_51 = arith.constant 1 : i32
    return
  }
  func.func @transform_0(%arg0: i32) -> (i32, i32) {
    %c0_i32 = arith.constant 0 : i32
    %c0_i32_0 = arith.constant 0 : i32
    return %arg0, %c0_i32 : i32, i32
  }
  func.func @transform_1(%arg0: i32) -> i32 {
    %c0_i32 = arith.constant 0 : i32
    %c0_i32_0 = arith.constant 0 : i32
    return %c0_i32 : i32
  }
  func.func @transform_2(%arg0: i32) -> i32 {
    %c0_i32 = arith.constant 0 : i32
    %c0_i32_0 = arith.constant 0 : i32
    return %c0_i32 : i32
  }
  func.func @transform_3(%arg0: i32) -> (i32, i32) {
    %c0_i32 = arith.constant 0 : i32
    %c0_i32_0 = arith.constant 0 : i32
    %c0_i32_1 = arith.constant 0 : i32
    return %c0_i32, %c0_i32_0 : i32, i32
  }
  func.func @transform_4(%arg0: i32) -> (i32, i32) {
    %c0_i32 = arith.constant 0 : i32
    %c0_i32_0 = arith.constant 0 : i32
    %c0_i32_1 = arith.constant 0 : i32
    return %c0_i32, %c0_i32_0 : i32, i32
  }
  func.func @transform_5(%arg0: i32) -> (i32, i32) {
    %c0_i32 = arith.constant 0 : i32
    %c0_i32_0 = arith.constant 0 : i32
    return %arg0, %c0_i32 : i32, i32
  }
}

</mosaic_0001>

<llo_original>
// kernel: triplet_forward.1
$region0: #{triplet_forward.1}
  #allocation0 [shape = 'u32[]', space=smem, size = 0x4, offset = 0x4, fixed_abs, tag = 'smem constant byte address 0x4 - core index']
  #allocation1 [shape = 'u32[144,128]{1,0:T(1,128)}', space=vmem, size = 0x12000, scoped, tag = 'internal scratch']
  %s0 = inlined_call_operand.vmem [shape: f32[16,256], index: 0, kind: input, shape index: {}]
  %s1 = inlined_call_operand.vmem [shape: f32[72], index: 1, kind: input, shape index: {}]
  %s2 = inlined_call_operand.vmem [shape: f32[8], index: 2, kind: input, shape index: {}]
  %s3 = inlined_call_operand.vmem [shape: bf16[32,2048], index: 3, kind: input, shape index: {}]
  %s4 = inlined_call_operand.vmem [shape: f32[1,32], index: 4, kind: input, shape index: {}]
  %s5 = inlined_call_operand.vmem [shape: f32[16,32], index: 5, kind: output, shape index: {}]
  %s6 = sld [smem:[#allocation0]]
  $region38: #{triplet_forward.1} parent=0
    _
  %s8 = ssub.s32 1, %s6
  %s9 = scalar_select 0, %s8, %s6
  $region1: #{triplet_forward.1} parent=0
    #allocation2 [shape = 'u8[512]{0}', space=smem, size = 0x200, scoped, tag = 'input window, operand 1, single buffered']
    #allocation3 [shape = 's32[1]{0}', space=sflag, size = 0x4, scoped, tag = 'scoped memory for triplet_forward.1']
    #allocation4 [shape = 'u8[512]{0}', space=smem, size = 0x200, scoped, tag = 'input window, operand 2, single buffered']
    #allocation5 [shape = 's32[1]{0}', space=sflag, size = 0x4, scoped, tag = 'scoped memory for triplet_forward.1']
    %10 = vsyncpa [#allocation3], 0
    %11 = vsyncpa [#allocation5], 0
    // Predicated region
    $region2: #{triplet_forward.1} parent=1 // pred_check
      _
    $region3: #{triplet_forward.1} parent=1 // pred_check_branch
      %13 = sbr.rel (0) target = $region5
    $region4: #{triplet_forward.1} parent=1 // pred_region
      _
    $region5: #{triplet_forward.1} parent=1 // pred_fallthru
      _
    // Predicated region
    $region6: #{triplet_forward.1} parent=1 // pred_check
      _
    $region7: #{triplet_forward.1} parent=1 // pred_check_branch
      %15 = sbr.rel (0) target = $region9
    $region8: #{triplet_forward.1} parent=1 // pred_region
      %s17 = ssub.s32 16, 16
      %18 = vsyncadd [#allocation3], %s17
      %s20 = sshll.u32 %s1, 4
      %s21 = int_to_ptr.vmem [resolvable:$true] %s20
      %23 = dma.vmem_to_smem %s21, 16, [#allocation2], [#allocation3]
    $region9: #{triplet_forward.1} parent=1 // pred_fallthru
      _
    // Predicated region
    $region10: #{triplet_forward.1} parent=1 // pred_check
      _
    $region11: #{triplet_forward.1} parent=1 // pred_check_branch
      %25 = sbr.rel (0) target = $region13
    $region12: #{triplet_forward.1} parent=1 // pred_region
      %s27 = ssub.s32 16, 16
      %28 = vsyncadd [#allocation5], %s27
      %s30 = sshll.u32 %s2, 4
      %s31 = int_to_ptr.vmem [resolvable:$true] %s30
      %33 = dma.vmem_to_smem %s31, 16, [#allocation4], [#allocation5]
    $region13: #{triplet_forward.1} parent=1 // pred_fallthru
      _
    // Predicated region
    $region14: #{triplet_forward.1} parent=1 // pred_check
      _
    $region15: #{triplet_forward.1} parent=1 // pred_check_branch
      %35 = sbr.rel (0) target = $region17
    $region16: #{triplet_forward.1} parent=1 // pred_region
      _
    $region17: #{triplet_forward.1} parent=1 // pred_fallthru
      _
    // Predicated region
    $region18: #{triplet_forward.1} parent=1 // pred_check
      _
    $region19: #{triplet_forward.1} parent=1 // pred_check_branch
      %37 = sbr.rel (0) target = $region21
    $region20: #{triplet_forward.1} parent=1 // pred_region
      _
    $region21: #{triplet_forward.1} parent=1 // pred_fallthru
      _
    // Predicated region
    $region22: #{triplet_forward.1} parent=1 // pred_check
      _
    $region23: #{triplet_forward.1} parent=1 // pred_check_branch
      %39 = sbr.rel (0) target = $region25
    $region24: #{triplet_forward.1} parent=1 // pred_region
      %40 = dma.done [#allocation3], 16
    $region25: #{triplet_forward.1} parent=1 // pred_fallthru
      _
    // Predicated region
    $region26: #{triplet_forward.1} parent=1 // pred_check
      _
    $region27: #{triplet_forward.1} parent=1 // pred_check_branch
      %42 = sbr.rel (0) target = $region29
    $region28: #{triplet_forward.1} parent=1 // pred_region
      %43 = dma.done [#allocation5], 16
    $region29: #{triplet_forward.1} parent=1 // pred_fallthru
      _
    %44 = sfence
    %v46 = vlaneseq
    %v47 = vand.u32 %v46, 127
    %v48 = vadd.s32 %v47, 128
    %v49 = vshra.s32 %v47, 4
    %v50 = vshra.s32 %v48, 4
    %v51 = vand.u32 %v47, 15
    %v52 = vand.u32 %v48, 15
    %vm53 = vcmp.ge.s32.totalorder %v49, 1
    %vm54 = vcmp.ge.s32.totalorder %v50, 1
    %vm55 = vcmp.lt.s32.totalorder %v49, 15
    %vm56 = vcmp.lt.s32.totalorder %v50, 15
    %vm57 = vcmp.ge.s32.totalorder %v51, 1
    %vm58 = vcmp.ge.s32.totalorder %v52, 1
    %vm59 = vcmp.lt.s32.totalorder %v51, 15
    %vm60 = vcmp.lt.s32.totalorder %v52, 15
    %s61 = smul.u32 0, 2
    %s62 = smul.addr %s61, 8
    %s63 = scalar_lea.vmem %s0, %s62
    %v64 = vld [vmem:[%s63] sm:$0xff]
    %v65 = vld [vmem:[%s63 + $0x8] sm:$0xff]
    %v66 = vld [vmem:[%s63 + $0x10] sm:$0xff]
    %v67 = vld [vmem:[%s63 + $0x18] sm:$0xff]
    %68 = vrot.lane.b32.xlu0 %v64, 17
    %v69 = vpop.permute.xlu0 %68
    %70 = vrot.lane.b32.xlu0 %v66, 17
    %v71 = vpop.permute.xlu0 %70
    %72 = vrot.lane.b32.xlu0 %v65, 17
    %v73 = vpop.permute.xlu0 %72
    %74 = vrot.lane.b32.xlu0 %v67, 17
    %v75 = vpop.permute.xlu0 %74
    %vm76 = vcmp.lt.s32.totalorder %v47, 17
    %v77 = vsel %vm76, %v69, %v73
    %v78 = vsel %vm76, %v71, %v75
    %v79 = vsel %vm76, %v73, %v69
    %v80 = vsel %vm76, %v75, %v71
    %vm81 = vmand %vm53, %vm57
    %vm82 = vmand %vm54, %vm58
    %v83 = vsel %vm81, %v79, 0.0
    %v84 = vsel %vm82, %v77, 0.0
    %v85 = vsel %vm81, %v80, 0.0
    %v86 = vsel %vm82, %v78, 0.0
    %87 = vrot.lane.b32.xlu0 %v64, 16
    %v88 = vpop.permute.xlu0 %87
    %89 = vrot.lane.b32.xlu0 %v66, 16
    %v90 = vpop.permute.xlu0 %89
    %91 = vrot.lane.b32.xlu0 %v65, 16
    %v92 = vpop.permute.xlu0 %91
    %93 = vrot.lane.b32.xlu0 %v67, 16
    %v94 = vpop.permute.xlu0 %93
    %vm95 = vcmp.lt.s32.totalorder %v47, 16
    %v96 = vsel %vm95, %v88, %v92
    %v97 = vsel %vm95, %v90, %v94
    %v98 = vsel %vm95, %v92, %v88
    %v99 = vsel %vm95, %v94, %v90
    %v100 = vsel %vm53, %v98, 0.0
    %v101 = vsel %vm54, %v96, 0.0
    %v102 = vsel %vm53, %v99, 0.0
    %v103 = vsel %vm54, %v97, 0.0
    %104 = vrot.lane.b32.xlu0 %v64, 15
    %v105 = vpop.permute.xlu0 %104
    %106 = vrot.lane.b32.xlu0 %v66, 15
    %v107 = vpop.permute.xlu0 %106
    %108 = vrot.lane.b32.xlu0 %v65, 15
    %v109 = vpop.permute.xlu0 %108
    %110 = vrot.lane.b32.xlu0 %v67, 15
    %v111 = vpop.permute.xlu0 %110
    %vm112 = vcmp.lt.s32.totalorder %v47, 15
    %v113 = vsel %vm112, %v105, %v109
    %v114 = vsel %vm112, %v107, %v111
    %v115 = vsel %vm112, %v109, %v105
    %v116 = vsel %vm112, %v111, %v107
    %vm117 = vmand %vm53, %vm59
    %vm118 = vmand %vm54, %vm60
    %v119 = vsel %vm117, %v115, 0.0
    %v120 = vsel %vm118, %v113, 0.0
    %v121 = vsel %vm117, %v116, 0.0
    %v122 = vsel %vm118, %v114, 0.0
    %123 = vrot.lane.b32.xlu0 %v64, 1
    %v124 = vpop.permute.xlu0 %123
    %125 = vrot.lane.b32.xlu0 %v66, 1
    %v126 = vpop.permute.xlu0 %125
    %127 = vrot.lane.b32.xlu0 %v65, 1
    %v128 = vpop.permute.xlu0 %127
    %129 = vrot.lane.b32.xlu0 %v67, 1
    %v130 = vpop.permute.xlu0 %129
    %vm131 = vcmp.lt.s32.totalorder %v47, 1
    %v132 = vsel %vm131, %v124, %v128
    %v133 = vsel %vm131, %v126, %v130
    %v134 = vsel %vm131, %v128, %v124
    %v135 = vsel %vm131, %v130, %v126
    %v136 = vsel %vm57, %v134, 0.0
    %v137 = vsel %vm58, %v132, 0.0
    %v138 = vsel %vm57, %v135, 0.0
    %v139 = vsel %vm58, %v133, 0.0
    %140 = vrot.lane.b32.xlu0 %v64, 127
    %v141 = vpop.permute.xlu0 %140
    %142 = vrot.lane.b32.xlu0 %v66, 127
    %v143 = vpop.permute.xlu0 %142
    %144 = vrot.lane.b32.xlu0 %v65, 127
    %v145 = vpop.permute.xlu0 %144
    %146 = vrot.lane.b32.xlu0 %v67, 127
    %v147 = vpop.permute.xlu0 %146
    %vm148 = vcmp.lt.s32.totalorder %v47, 127
    %v149 = vsel %vm148, %v141, %v145
    %v150 = vsel %vm148, %v143, %v147
    %v151 = vsel %vm148, %v145, %v141
    %v152 = vsel %vm148, %v147, %v143
    %v153 = vsel %vm59, %v149, 0.0
    %v154 = vsel %vm60, %v151, 0.0
    %v155 = vsel %vm59, %v150, 0.0
    %v156 = vsel %vm60, %v152, 0.0
    %157 = vrot.lane.b32.xlu0 %v64, 113
    %v158 = vpop.permute.xlu0 %157
    %159 = vrot.lane.b32.xlu0 %v66, 113
    %v160 = vpop.permute.xlu0 %159
    %161 = vrot.lane.b32.xlu0 %v65, 113
    %v162 = vpop.permute.xlu0 %161
    %163 = vrot.lane.b32.xlu0 %v67, 113
    %v164 = vpop.permute.xlu0 %163
    %vm165 = vcmp.lt.s32.totalorder %v47, 113
    %v166 = vsel %vm165, %v158, %v162
    %v167 = vsel %vm165, %v160, %v164
    %v168 = vsel %vm165, %v162, %v158
    %v169 = vsel %vm165, %v164, %v160
    %vm170 = vmand %vm55, %vm57
    %vm171 = vmand %vm56, %vm58
    %v172 = vsel %vm170, %v166, 0.0
    %v173 = vsel %vm171, %v168, 0.0
    %v174 = vsel %vm170, %v167, 0.0
    %v175 = vsel %vm171, %v169, 0.0
    %176 = vrot.lane.b32.xlu0 %v64, 112
    %v177 = vpop.permute.xlu0 %176
    %178 = vrot.lane.b32.xlu0 %v66, 112
    %v179 = vpop.permute.xlu0 %178
    %180 = vrot.lane.b32.xlu0 %v65, 112
    %v181 = vpop.permute.xlu0 %180
    %182 = vrot.lane.b32.xlu0 %v67, 112
    %v183 = vpop.permute.xlu0 %182
    %vm184 = vcmp.lt.s32.totalorder %v47, 112
    %v185 = vsel %vm184, %v177, %v181
    %v186 = vsel %vm184, %v179, %v183
    %v187 = vsel %vm184, %v181, %v177
    %v188 = vsel %vm184, %v183, %v179
    %v189 = vsel %vm55, %v185, 0.0
    %v190 = vsel %vm56, %v187, 0.0
    %v191 = vsel %vm55, %v186, 0.0
    %v192 = vsel %vm56, %v188, 0.0
    %193 = vrot.lane.b32.xlu0 %v64, 111
    %v194 = vpop.permute.xlu0 %193
    %195 = vrot.lane.b32.xlu0 %v66, 111
    %v196 = vpop.permute.xlu0 %195
    %197 = vrot.lane.b32.xlu0 %v65, 111
    %v198 = vpop.permute.xlu0 %197
    %199 = vrot.lane.b32.xlu0 %v67, 111
    %v200 = vpop.permute.xlu0 %199
    %vm201 = vcmp.lt.s32.totalorder %v47, 111
    %v202 = vsel %vm201, %v194, %v198
    %v203 = vsel %vm201, %v196, %v200
    %v204 = vsel %vm201, %v198, %v194
    %v205 = vsel %vm201, %v200, %v196
    %vm206 = vmand %vm55, %vm59
    %vm207 = vmand %vm56, %vm60
    %v208 = vsel %vm206, %v202, 0.0
    %v209 = vsel %vm207, %v204, 0.0
    %v210 = vsel %vm206, %v203, 0.0
    %v211 = vsel %vm207, %v205, 0.0
    %s212 = sld [smem:[#allocation2]]
    %v213 = vstv %s212
    %v214 = vmul.f32 %v83, %v213
    %v215 = vmul.f32 %v84, %v213
    %v216 = vmul.f32 %v85, %v213
    %v217 = vmul.f32 %v86, %v213
    %s218 = sld [smem:[#allocation2 + $0x8]]
    %v219 = vstv %s218
    %v220 = vmul.f32 %v100, %v219
    %v221 = vmul.f32 %v101, %v219
    %v222 = vmul.f32 %v102, %v219
    %v223 = vmul.f32 %v103, %v219
    %v224 = vadd.f32 %v214, %v220
    %v225 = vadd.f32 %v215, %v221
    %v226 = vadd.f32 %v216, %v222
    %v227 = vadd.f32 %v217, %v223
    %s228 = sld [smem:[#allocation2 + $0x10]]
    %v229 = vstv %s228
    %v230 = vmul.f32 %v119, %v229
    %v231 = vmul.f32 %v120, %v229
    %v232 = vmul.f32 %v121, %v229
    %v233 = vmul.f32 %v122, %v229
    %v234 = vadd.f32 %v224, %v230
    %v235 = vadd.f32 %v225, %v231
    %v236 = vadd.f32 %v226, %v232
    %v237 = vadd.f32 %v227, %v233
    %s238 = sld [smem:[#allocation2 + $0x18]]
    %v239 = vstv %s238
    %v240 = vmul.f32 %v136, %v239
    %v241 = vmul.f32 %v137, %v239
    %v242 = vmul.f32 %v138, %v239
    %v243 = vmul.f32 %v139, %v239
    %v244 = vadd.f32 %v234, %v240
    %v245 = vadd.f32 %v235, %v241
    %v246 = vadd.f32 %v236, %v242
    %v247 = vadd.f32 %v237, %v243
    %s248 = sld [smem:[#allocation2 + $0x20]]
    %v249 = vstv %s248
    %v250 = vmul.f32 %v64, %v249
    %v251 = vmul.f32 %v65, %v249
    %v252 = vmul.f32 %v66, %v249
    %v253 = vmul.f32 %v67, %v249
    %v254 = vadd.f32 %v244, %v250
    %v255 = vadd.f32 %v245, %v251
    %v256 = vadd.f32 %v246, %v252
    %v257 = vadd.f32 %v247, %v253
    %s258 = sld [smem:[#allocation2 + $0x28]]
    %v259 = vstv %s258
    %v260 = vmul.f32 %v153, %v259
    %v261 = vmul.f32 %v154, %v259
    %v262 = vmul.f32 %v155, %v259
    %v263 = vmul.f32 %v156, %v259
    %v264 = vadd.f32 %v254, %v260
    %v265 = vadd.f32 %v255, %v261
    %v266 = vadd.f32 %v256, %v262
    %v267 = vadd.f32 %v257, %v263
    %s268 = sld [smem:[#allocation2 + $0x30]]
    %v269 = vstv %s268
    %v270 = vmul.f32 %v172, %v269
    %v271 = vmul.f32 %v173, %v269
    %v272 = vmul.f32 %v174, %v269
    %v273 = vmul.f32 %v175, %v269
    %v274 = vadd.f32 %v264, %v270
    %v275 = vadd.f32 %v265, %v271
    %v276 = vadd.f32 %v266, %v272
    %v277 = vadd.f32 %v267, %v273
    %s278 = sld [smem:[#allocation2 + $0x38]]
    %v279 = vstv %s278
    %v280 = vmul.f32 %v189, %v279
    %v281 = vmul.f32 %v190, %v279
    %v282 = vmul.f32 %v191, %v279
    %v283 = vmul.f32 %v192, %v279
    %v284 = vadd.f32 %v274, %v280
    %v285 = vadd.f32 %v275, %v281
    %v286 = vadd.f32 %v276, %v282
    %v287 = vadd.f32 %v277, %v283
    %s288 = sld [smem:[#allocation2 + $0x40]]
    %v289 = vstv %s288
    %v290 = vmul.f32 %v208, %v289
    %v291 = vmul.f32 %v209, %v289
    %v292 = vmul.f32 %v210, %v289
    %v293 = vmul.f32 %v211, %v289
    %v294 = vadd.f32 %v284, %v290
    %v295 = vadd.f32 %v285, %v291
    %v296 = vadd.f32 %v286, %v292
    %v297 = vadd.f32 %v287, %v293
    %s298 = sld [smem:[#allocation4]]
    %v299 = vstv %s298
    %v300 = vadd.f32 %v294, %v299
    %v301 = vadd.f32 %v295, %v299
    %v302 = vadd.f32 %v296, %v299
    %v303 = vadd.f32 %v297, %v299
    %v304 = vmax.f32 %v300, 0.0
    %v305 = vmax.f32 %v301, 0.0
    %v306 = vmax.f32 %v302, 0.0
    %v307 = vmax.f32 %v303, 0.0
    %v308 = vpack.c.bf16 %v306, %v304
    %v309 = vpack.c.bf16 %v307, %v305
    %v310 = vld [vmem:[%s3] sm:$0xff]
    %v311 = vld [vmem:[%s3 + $0x40] sm:$0xff]
    %v312 = vld [vmem:[%s3 + $0x80] sm:$0xff]
    %v313 = vld [vmem:[%s3 + $0xc0] sm:$0xff]
    %s314 = sld [smem:[#allocation2 + $0x1]]
    %v315 = vstv %s314
    %v316 = vmul.f32 %v83, %v315
    %v317 = vmul.f32 %v84, %v315
    %v318 = vmul.f32 %v85, %v315
    %v319 = vmul.f32 %v86, %v315
    %s320 = sld [smem:[#allocation2 + $0x9]]
    %v321 = vstv %s320
    %v322 = vmul.f32 %v100, %v321
    %v323 = vmul.f32 %v101, %v321
    %v324 = vmul.f32 %v102, %v321
    %v325 = vmul.f32 %v103, %v321
    %v326 = vadd.f32 %v316, %v322
    %v327 = vadd.f32 %v317, %v323
    %v328 = vadd.f32 %v318, %v324
    %v329 = vadd.f32 %v319, %v325
    %s330 = sld [smem:[#allocation2 + $0x11]]
    %v331 = vstv %s330
    %v332 = vmul.f32 %v119, %v331
    %v333 = vmul.f32 %v120, %v331
    %v334 = vmul.f32 %v121, %v331
    %v335 = vmul.f32 %v122, %v331
    %v336 = vadd.f32 %v326, %v332
    %v337 = vadd.f32 %v327, %v333
    %v338 = vadd.f32 %v328, %v334
    %v339 = vadd.f32 %v329, %v335
    %s340 = sld [smem:[#allocation2 + $0x19]]
    %v341 = vstv %s340
    %v342 = vmul.f32 %v136, %v341
    %v343 = vmul.f32 %v137, %v341
    %v344 = vmul.f32 %v138, %v341
    %v345 = vmul.f32 %v139, %v341
    %v346 = vadd.f32 %v336, %v342
    %v347 = vadd.f32 %v337, %v343
    %v348 = vadd.f32 %v338, %v344
    %v349 = vadd.f32 %v339, %v345
    %s350 = sld [smem:[#allocation2 + $0x21]]
    %v351 = vstv %s350
    %v352 = vmul.f32 %v64, %v351
    %v353 = vmul.f32 %v65, %v351
    %v354 = vmul.f32 %v66, %v351
    %v355 = vmul.f32 %v67, %v351
    %v356 = vadd.f32 %v346, %v352
    %v357 = vadd.f32 %v347, %v353
    %v358 = vadd.f32 %v348, %v354
    %v359 = vadd.f32 %v349, %v355
    %s360 = sld [smem:[#allocation2 + $0x29]]
    %v361 = vstv %s360
    %v362 = vmul.f32 %v153, %v361
    %v363 = vmul.f32 %v154, %v361
    %v364 = vmul.f32 %v155, %v361
    %v365 = vmul.f32 %v156, %v361
    %v366 = vadd.f32 %v356, %v362
    %v367 = vadd.f32 %v357, %v363
    %v368 = vadd.f32 %v358, %v364
    %v369 = vadd.f32 %v359, %v365
    %s370 = sld [smem:[#allocation2 + $0x31]]
    %v371 = vstv %s370
    %v372 = vmul.f32 %v172, %v371
    %v373 = vmul.f32 %v173, %v371
    %v374 = vmul.f32 %v174, %v371
    %v375 = vmul.f32 %v175, %v371
    %v376 = vadd.f32 %v366, %v372
    %v377 = vadd.f32 %v367, %v373
    %v378 = vadd.f32 %v368, %v374
    %v379 = vadd.f32 %v369, %v375
    %s380 = sld [smem:[#allocation2 + $0x39]]
    %v381 = vstv %s380
    %v382 = vmul.f32 %v189, %v381
    %v383 = vmul.f32 %v190, %v381
    %v384 = vmul.f32 %v191, %v381
    %v385 = vmul.f32 %v192, %v381
    %v386 = vadd.f32 %v376, %v382
    %v387 = vadd.f32 %v377, %v383
    %v388 = vadd.f32 %v378, %v384
    %v389 = vadd.f32 %v379, %v385
    %s390 = sld [smem:[#allocation2 + $0x41]]
    %v391 = vstv %s390
    %v392 = vmul.f32 %v208, %v391
    %v393 = vmul.f32 %v209, %v391
    %v394 = vmul.f32 %v210, %v391
    %v395 = vmul.f32 %v211, %v391
    %v396 = vadd.f32 %v386, %v392
    %v397 = vadd.f32 %v387, %v393
    %v398 = vadd.f32 %v388, %v394
    %v399 = vadd.f32 %v389, %v395
    %s400 = sld [smem:[#allocation4 + $0x1]]
    %v401 = vstv %s400
    %v402 = vadd.f32 %v396, %v401
    %v403 = vadd.f32 %v397, %v401
    %v404 = vadd.f32 %v398, %v401
    %v405 = vadd.f32 %v399, %v401
    %v406 = vmax.f32 %v402, 0.0
    %v407 = vmax.f32 %v403, 0.0
    %v408 = vmax.f32 %v404, 0.0
    %v409 = vmax.f32 %v405, 0.0
    %v410 = vpack.c.bf16 %v408, %v406
    %v411 = vpack.c.bf16 %v409, %v407
    %v412 = vld [vmem:[%s3 + $0x8] sm:$0xff]
    %v413 = vld [vmem:[%s3 + $0x48] sm:$0xff]
    %v414 = vld [vmem:[%s3 + $0x88] sm:$0xff]
    %v415 = vld [vmem:[%s3 + $0xc8] sm:$0xff]
    %v420 = vunpack.c.l.b16 %v412
    %v421 = vunpack.c.h.b16 %v412
    %v422 = vunpack.c.l.b16 %v413
    %v423 = vunpack.c.h.b16 %v413
    %v424 = vunpack.c.l.b16 %v414
    %v425 = vunpack.c.h.b16 %v414
    %v426 = vunpack.c.l.b16 %v415
    %v427 = vunpack.c.h.b16 %v415
    %v428 = vpack.c.b16 %v422, %v420
    %v429 = vpack.c.b16 %v423, %v421
    %v430 = vpack.c.b16 %v426, %v424
    %v431 = vpack.c.b16 %v427, %v425
    %436 = vmatprep.subr.bf16.mxu0 %v429
    %437 = vmatpush1.bf16.xpose.msra.mxu0 %v428
    %438 = vmatprep.subr.bf16.mxu0 %v431
    %439 = vmatpush1.bf16.xpose.msra.mxu0 %v430
    %440 = vmatprep.subr.bf16.mxu0 0
    %441 = vmatpush1.bf16.xpose.msra.mxu0 0
    %442 = vmatprep.subr.bf16.mxu0 0
    %443 = vmatpush1.bf16.xpose.msra.mxu0 0
    %444 = vmatprep.subr.bf16.mxu0 0
    %445 = vmatpush1.bf16.xpose.msra.mxu0 0
    %446 = vmatprep.subr.bf16.mxu0 0
    %447 = vmatpush1.bf16.xpose.msra.mxu0 0
    %448 = vmatprep.subr.bf16.mxu0 0
    %449 = vmatpush1.bf16.xpose.msra.mxu0 0
    %450 = vmatprep.subr.bf16.mxu0 0
    %451 = vmatpush1.bf16.xpose.msra.mxu0 0
    %452 = vmatprep.subr.bf16.mxu0 0
    %453 = vmatpush1.bf16.xpose.msra.mxu0 0
    %454 = vmatprep.subr.bf16.mxu0 0
    %455 = vmatpush1.bf16.xpose.msra.mxu0 0
    %456 = vmatprep.subr.bf16.mxu0 0
    %457 = vmatpush1.bf16.xpose.msra.mxu0 0
    %458 = vmatprep.subr.bf16.mxu0 0
    %459 = vmatpush1.bf16.xpose.msra.mxu0 0
    %460 = vmatprep.subr.bf16.mxu0 0
    %461 = vmatpush1.bf16.xpose.msra.mxu0 0
    %462 = vmatprep.subr.bf16.mxu0 0
    %463 = vmatpush1.bf16.xpose.msra.mxu0 0
    %464 = vmatprep.subr.bf16.mxu0 0
    %465 = vmatpush1.bf16.xpose.msra.mxu0 0
    %466 = vmatprep.subr.bf16.mxu0 0
    %467 = vmatpush1.bf16.xpose.msra.mxu0 0
    %468 = vmatprep.mubr.bf16.mxu0 %v411
    %469 = vmatmul.mubr.bf16.gmra.mrb[0].mxu0 %v410
    %v470 = vpop.f32.mrb[0].mxu0
    %v471 = vadd.f32 0.0, %v470
    %v472 = vpop.f32.mrb[0].mxu0
    %v473 = vpop.f32.mrb[0].mxu0
    %v474 = vadd.f32 0.0, %v473
    %v475 = vpop.f32.mrb[0].mxu0
    %476 = vdwg.mxu0
    %v481 = vunpack.c.l.b16 %v310
    %v482 = vunpack.c.h.b16 %v310
    %v483 = vunpack.c.l.b16 %v311
    %v484 = vunpack.c.h.b16 %v311
    %v485 = vunpack.c.l.b16 %v312
    %v486 = vunpack.c.h.b16 %v312
    %v487 = vunpack.c.l.b16 %v313
    %v488 = vunpack.c.h.b16 %v313
    %v489 = vpack.c.b16 %v483, %v481
    %v490 = vpack.c.b16 %v484, %v482
    %v491 = vpack.c.b16 %v487, %v485
    %v492 = vpack.c.b16 %v488, %v486
    %497 = vmatprep.subr.bf16.mxu0 %v490
    %498 = vmatpush1.bf16.xpose.msra.mxu0 %v489
    %499 = vmatprep.subr.bf16.mxu0 %v492
    %500 = vmatpush1.bf16.xpose.msra.mxu0 %v491
    %501 = vmatprep.subr.bf16.mxu0 0
    %502 = vmatpush1.bf16.xpose.msra.mxu0 0
    %503 = vmatprep.subr.bf16.mxu0 0
    %504 = vmatpush1.bf16.xpose.msra.mxu0 0
    %505 = vmatprep.subr.bf16.mxu0 0
    %506 = vmatpush1.bf16.xpose.msra.mxu0 0
    %507 = vmatprep.subr.bf16.mxu0 0
    %508 = vmatpush1.bf16.xpose.msra.mxu0 0
    %509 = vmatprep.subr.bf16.mxu0 0
    %510 = vmatpush1.bf16.xpose.msra.mxu0 0
    %511 = vmatprep.subr.bf16.mxu0 0
    %512 = vmatpush1.bf16.xpose.msra.mxu0 0
    %513 = vmatprep.subr.bf16.mxu0 0
    %514 = vmatpush1.bf16.xpose.msra.mxu0 0
    %515 = vmatprep.subr.bf16.mxu0 0
    %516 = vmatpush1.bf16.xpose.msra.mxu0 0
    %517 = vmatprep.subr.bf16.mxu0 0
    %518 = vmatpush1.bf16.xpose.msra.mxu0 0
    %519 = vmatprep.subr.bf16.mxu0 0
    %520 = vmatpush1.bf16.xpose.msra.mxu0 0
    %521 = vmatprep.subr.bf16.mxu0 0
    %522 = vmatpush1.bf16.xpose.msra.mxu0 0
    %523 = vmatprep.subr.bf16.mxu0 0
    %524 = vmatpush1.bf16.xpose.msra.mxu0 0
    %525 = vmatprep.subr.bf16.mxu0 0
    %526 = vmatpush1.bf16.xpose.msra.mxu0 0
    %527 = vmatprep.subr.bf16.mxu0 0
    %528 = vmatpush1.bf16.xpose.msra.mxu0 0
    %529 = vmatprep.mubr.bf16.mxu0 %v309
    %530 = vmatmul.mubr.bf16.gmra.mrb[0].mxu0 %v308
    %v531 = vpop.f32.mrb[0].mxu0
    %v532 = vadd.f32 %v471, %v531
    %v533 = vpop.f32.mrb[0].mxu0
    %v534 = vpop.f32.mrb[0].mxu0
    %v535 = vadd.f32 %v474, %v534
    %v536 = vpop.f32.mrb[0].mxu0
    %537 = vdwg.mxu0
    %s538 = sld [smem:[#allocation2 + $0x2]]
    %v539 = vstv %s538
    %v540 = vmul.f32 %v83, %v539
    %v541 = vmul.f32 %v84, %v539
    %v542 = vmul.f32 %v85, %v539
    %v543 = vmul.f32 %v86, %v539
    %s544 = sld [smem:[#allocation2 + $0xa]]
    %v545 = vstv %s544
    %v546 = vmul.f32 %v100, %v545
    %v547 = vmul.f32 %v101, %v545
    %v548 = vmul.f32 %v102, %v545
    %v549 = vmul.f32 %v103, %v545
    %v550 = vadd.f32 %v540, %v546
    %v551 = vadd.f32 %v541, %v547
    %v552 = vadd.f32 %v542, %v548
    %v553 = vadd.f32 %v543, %v549
    %s554 = sld [smem:[#allocation2 + $0x12]]
    %v555 = vstv %s554
    %v556 = vmul.f32 %v119, %v555
    %v557 = vmul.f32 %v120, %v555
    %v558 = vmul.f32 %v121, %v555
    %v559 = vmul.f32 %v122, %v555
    %v560 = vadd.f32 %v550, %v556
    %v561 = vadd.f32 %v551, %v557
    %v562 = vadd.f32 %v552, %v558
    %v563 = vadd.f32 %v553, %v559
    %s564 = sld [smem:[#allocation2 + $0x1a]]
    %v565 = vstv %s564
    %v566 = vmul.f32 %v136, %v565
    %v567 = vmul.f32 %v137, %v565
    %v568 = vmul.f32 %v138, %v565
    %v569 = vmul.f32 %v139, %v565
    %v570 = vadd.f32 %v560, %v566
    %v571 = vadd.f32 %v561, %v567
    %v572 = vadd.f32 %v562, %v568
    %v573 = vadd.f32 %v563, %v569
    %s574 = sld [smem:[#allocation2 + $0x22]]
    %v575 = vstv %s574
    %v576 = vmul.f32 %v64, %v575
    %v577 = vmul.f32 %v65, %v575
    %v578 = vmul.f32 %v66, %v575
    %v579 = vmul.f32 %v67, %v575
    %v580 = vadd.f32 %v570, %v576
    %v581 = vadd.f32 %v571, %v577
    %v582 = vadd.f32 %v572, %v578
    %v583 = vadd.f32 %v573, %v579
    %s584 = sld [smem:[#allocation2 + $0x2a]]
    %v585 = vstv %s584
    %v586 = vmul.f32 %v153, %v585
    %v587 = vmul.f32 %v154, %v585
    %v588 = vmul.f32 %v155, %v585
    %v589 = vmul.f32 %v156, %v585
    %v590 = vadd.f32 %v580, %v586
    %v591 = vadd.f32 %v581, %v587
    %v592 = vadd.f32 %v582, %v588
    %v593 = vadd.f32 %v583, %v589
    %s594 = sld [smem:[#allocation2 + $0x32]]
    %v595 = vstv %s594
    %v596 = vmul.f32 %v172, %v595
    %v597 = vmul.f32 %v173, %v595
    %v598 = vmul.f32 %v174, %v595
    %v599 = vmul.f32 %v175, %v595
    %v600 = vadd.f32 %v590, %v596
    %v601 = vadd.f32 %v591, %v597
    %v602 = vadd.f32 %v592, %v598
    %v603 = vadd.f32 %v593, %v599
    %s604 = sld [smem:[#allocation2 + $0x3a]]
    %v605 = vstv %s604
    %v606 = vmul.f32 %v189, %v605
    %v607 = vmul.f32 %v190, %v605
    %v608 = vmul.f32 %v191, %v605
    %v609 = vmul.f32 %v192, %v605
    %v610 = vadd.f32 %v600, %v606
    %v611 = vadd.f32 %v601, %v607
    %v612 = vadd.f32 %v602, %v608
    %v613 = vadd.f32 %v603, %v609
    %s614 = sld [smem:[#allocation2 + $0x42]]
    %v615 = vstv %s614
    %v616 = vmul.f32 %v208, %v615
    %v617 = vmul.f32 %v209, %v615
    %v618 = vmul.f32 %v210, %v615
    %v619 = vmul.f32 %v211, %v615
    %v620 = vadd.f32 %v610, %v616
    %v621 = vadd.f32 %v611, %v617
    %v622 = vadd.f32 %v612, %v618
    %v623 = vadd.f32 %v613, %v619
    %s624 = sld [smem:[#allocation4 + $0x2]]
    %v625 = vstv %s624
    %v626 = vadd.f32 %v620, %v625
    %v627 = vadd.f32 %v621, %v625
    %v628 = vadd.f32 %v622, %v625
    %v629 = vadd.f32 %v623, %v625
    %v630 = vmax.f32 %v626, 0.0
    %v631 = vmax.f32 %v627, 0.0
    %v632 = vmax.f32 %v628, 0.0
    %v633 = vmax.f32 %v629, 0.0
    %v634 = vpack.c.bf16 %v632, %v630
    %v635 = vpack.c.bf16 %v633, %v631
    %v636 = vld [vmem:[%s3 + $0x10] sm:$0xff]
    %v637 = vld [vmem:[%s3 + $0x50] sm:$0xff]
    %v638 = vld [vmem:[%s3 + $0x90] sm:$0xff]
    %v639 = vld [vmem:[%s3 + $0xd0] sm:$0xff]
    %v644 = vunpack.c.l.b16 %v636
    %v645 = vunpack.c.h.b16 %v636
    %v646 = vunpack.c.l.b16 %v637
    %v647 = vunpack.c.h.b16 %v637
    %v648 = vunpack.c.l.b16 %v638
    %v649 = vunpack.c.h.b16 %v638
    %v650 = vunpack.c.l.b16 %v639
    %v651 = vunpack.c.h.b16 %v639
    %v652 = vpack.c.b16 %v646, %v644
    %v653 = vpack.c.b16 %v647, %v645
    %v654 = vpack.c.b16 %v650, %v648
    %v655 = vpack.c.b16 %v651, %v649
    %660 = vmatprep.subr.bf16.mxu0 %v653
    %661 = vmatpush1.bf16.xpose.msra.mxu0 %v652
    %662 = vmatprep.subr.bf16.mxu0 %v655
    %663 = vmatpush1.bf16.xpose.msra.mxu0 %v654
    %664 = vmatprep.subr.bf16.mxu0 0
    %665 = vmatpush1.bf16.xpose.msra.mxu0 0
    %666 = vmatprep.subr.bf16.mxu0 0
    %667 = vmatpush1.bf16.xpose.msra.mxu0 0
    %668 = vmatprep.subr.bf16.mxu0 0
    %669 = vmatpush1.bf16.xpose.msra.mxu0 0
    %670 = vmatprep.subr.bf16.mxu0 0
    %671 = vmatpush1.bf16.xpose.msra.mxu0 0
    %672 = vmatprep.subr.bf16.mxu0 0
    %673 = vmatpush1.bf16.xpose.msra.mxu0 0
    %674 = vmatprep.subr.bf16.mxu0 0
    %675 = vmatpush1.bf16.xpose.msra.mxu0 0
    %676 = vmatprep.subr.bf16.mxu0 0
    %677 = vmatpush1.bf16.xpose.msra.mxu0 0
    %678 = vmatprep.subr.bf16.mxu0 0
    %679 = vmatpush1.bf16.xpose.msra.mxu0 0
    %680 = vmatprep.subr.bf16.mxu0 0
    %681 = vmatpush1.bf16.xpose.msra.mxu0 0
    %682 = vmatprep.subr.bf16.mxu0 0
    %683 = vmatpush1.bf16.xpose.msra.mxu0 0
    %684 = vmatprep.subr.bf16.mxu0 0
    %685 = vmatpush1.bf16.xpose.msra.mxu0 0
    %686 = vmatprep.subr.bf16.mxu0 0
    %687 = vmatpush1.bf16.xpose.msra.mxu0 0
    %688 = vmatprep.subr.bf16.mxu0 0
    %689 = vmatpush1.bf16.xpose.msra.mxu0 0
    %690 = vmatprep.subr.bf16.mxu0 0
    %691 = vmatpush1.bf16.xpose.msra.mxu0 0
    %692 = vmatprep.mubr.bf16.mxu0 %v635
    %693 = vmatmul.mubr.bf16.gmra.mrb[0].mxu0 %v634
    %v694 = vpop.f32.mrb[0].mxu0
    %v695 = vadd.f32 0.0, %v694
    %v696 = vpop.f32.mrb[0].mxu0
    %v697 = vpop.f32.mrb[0].mxu0
    %v698 = vadd.f32 0.0, %v697
    %v699 = vpop.f32.mrb[0].mxu0
    %700 = vdwg.mxu0
    %v701 = vadd.f32 %v532, %v695
    %v702 = vadd.f32 %v535, %v698
    %s703 = sld [smem:[#allocation2 + $0x3]]
    %v704 = vstv %s703
    %v705 = vmul.f32 %v83, %v704
    %v706 = vmul.f32 %v84, %v704
    %v707 = vmul.f32 %v85, %v704
    %v708 = vmul.f32 %v86, %v704
    %s709 = sld [smem:[#allocation2 + $0xb]]
    %v710 = vstv %s709
    %v711 = vmul.f32 %v100, %v710
    %v712 = vmul.f32 %v101, %v710
    %v713 = vmul.f32 %v102, %v710
    %v714 = vmul.f32 %v103, %v710
    %v715 = vadd.f32 %v705, %v711
    %v716 = vadd.f32 %v706, %v712
    %v717 = vadd.f32 %v707, %v713
    %v718 = vadd.f32 %v708, %v714
    %s719 = sld [smem:[#allocation2 + $0x13]]
    %v720 = vstv %s719
    %v721 = vmul.f32 %v119, %v720
    %v722 = vmul.f32 %v120, %v720
    %v723 = vmul.f32 %v121, %v720
    %v724 = vmul.f32 %v122, %v720
    %v725 = vadd.f32 %v715, %v721
    %v726 = vadd.f32 %v716, %v722
    %v727 = vadd.f32 %v717, %v723
    %v728 = vadd.f32 %v718, %v724
    %s729 = sld [smem:[#allocation2 + $0x1b]]
    %v730 = vstv %s729
    %v731 = vmul.f32 %v136, %v730
    %v732 = vmul.f32 %v137, %v730
    %v733 = vmul.f32 %v138, %v730
    %v734 = vmul.f32 %v139, %v730
    %v735 = vadd.f32 %v725, %v731
    %v736 = vadd.f32 %v726, %v732
    %v737 = vadd.f32 %v727, %v733
    %v738 = vadd.f32 %v728, %v734
    %s739 = sld [smem:[#allocation2 + $0x23]]
    %v740 = vstv %s739
    %v741 = vmul.f32 %v64, %v740
    %v742 = vmul.f32 %v65, %v740
    %v743 = vmul.f32 %v66, %v740
    %v744 = vmul.f32 %v67, %v740
    %v745 = vadd.f32 %v735, %v741
    %v746 = vadd.f32 %v736, %v742
    %v747 = vadd.f32 %v737, %v743
    %v748 = vadd.f32 %v738, %v744
    %s749 = sld [smem:[#allocation2 + $0x2b]]
    %v750 = vstv %s749
    %v751 = vmul.f32 %v153, %v750
    %v752 = vmul.f32 %v154, %v750
    %v753 = vmul.f32 %v155, %v750
    %v754 = vmul.f32 %v156, %v750
    %v755 = vadd.f32 %v745, %v751
    %v756 = vadd.f32 %v746, %v752
    %v757 = vadd.f32 %v747, %v753
    %v758 = vadd.f32 %v748, %v754
    %s759 = sld [smem:[#allocation2 + $0x33]]
    %v760 = vstv %s759
    %v761 = vmul.f32 %v172, %v760
    %v762 = vmul.f32 %v173, %v760
    %v763 = vmul.f32 %v174, %v760
    %v764 = vmul.f32 %v175, %v760
    %v765 = vadd.f32 %v755, %v761
    %v766 = vadd.f32 %v756, %v762
    %v767 = vadd.f32 %v757, %v763
    %v768 = vadd.f32 %v758, %v764
    %s769 = sld [smem:[#allocation2 + $0x3b]]
    %v770 = vstv %s769
    %v771 = vmul.f32 %v189, %v770
    %v772 = vmul.f32 %v190, %v770
    %v773 = vmul.f32 %v191, %v770
    %v774 = vmul.f32 %v192, %v770
    %v775 = vadd.f32 %v765, %v771
    %v776 = vadd.f32 %v766, %v772
    %v777 = vadd.f32 %v767, %v773
    %v778 = vadd.f32 %v768, %v774
    %s779 = sld [smem:[#allocation2 + $0x43]]
    %v780 = vstv %s779
    %v781 = vmul.f32 %v208, %v780
    %v782 = vmul.f32 %v209, %v780
    %v783 = vmul.f32 %v210, %v780
    %v784 = vmul.f32 %v211, %v780
    %v785 = vadd.f32 %v775, %v781
    %v786 = vadd.f32 %v776, %v782
    %v787 = vadd.f32 %v777, %v783
    %v788 = vadd.f32 %v778, %v784
    %s789 = sld [smem:[#allocation4 + $0x3]]
    %v790 = vstv %s789
    %v791 = vadd.f32 %v785, %v790
    %v792 = vadd.f32 %v786, %v790
    %v793 = vadd.f32 %v787, %v790
    %v794 = vadd.f32 %v788, %v790
    %v795 = vmax.f32 %v791, 0.0
    %v796 = vmax.f32 %v792, 0.0
    %v797 = vmax.f32 %v793, 0.0
    %v798 = vmax.f32 %v794, 0.0
    %v799 = vpack.c.bf16 %v797, %v795
    %v800 = vpack.c.bf16 %v798, %v796
    %v801 = vld [vmem:[%s3 + $0x18] sm:$0xff]
    %v802 = vld [vmem:[%s3 + $0x58] sm:$0xff]
    %v803 = vld [vmem:[%s3 + $0x98] sm:$0xff]
    %v804 = vld [vmem:[%s3 + $0xd8] sm:$0xff]
    %v809 = vunpack.c.l.b16 %v801
    %v810 = vunpack.c.h.b16 %v801
    %v811 = vunpack.c.l.b16 %v802
    %v812 = vunpack.c.h.b16 %v802
    %v813 = vunpack.c.l.b16 %v803
    %v814 = vunpack.c.h.b16 %v803
    %v815 = vunpack.c.l.b16 %v804
    %v816 = vunpack.c.h.b16 %v804
    %v817 = vpack.c.b16 %v811, %v809
    %v818 = vpack.c.b16 %v812, %v810
    %v819 = vpack.c.b16 %v815, %v813
    %v820 = vpack.c.b16 %v816, %v814
    %825 = vmatprep.subr.bf16.mxu0 %v818
    %826 = vmatpush1.bf16.xpose.msra.mxu0 %v817
    %827 = vmatprep.subr.bf16.mxu0 %v820
    %828 = vmatpush1.bf16.xpose.msra.mxu0 %v819
    %829 = vmatprep.subr.bf16.mxu0 0
    %830 = vmatpush1.bf16.xpose.msra.mxu0 0
    %831 = vmatprep.subr.bf16.mxu0 0
    %832 = vmatpush1.bf16.xpose.msra.mxu0 0
    %833 = vmatprep.subr.bf16.mxu0 0
    %834 = vmatpush1.bf16.xpose.msra.mxu0 0
    %835 = vmatprep.subr.bf16.mxu0 0
    %836 = vmatpush1.bf16.xpose.msra.mxu0 0
    %837 = vmatprep.subr.bf16.mxu0 0
    %838 = vmatpush1.bf16.xpose.msra.mxu0 0
    %839 = vmatprep.subr.bf16.mxu0 0
    %840 = vmatpush1.bf16.xpose.msra.mxu0 0
    %841 = vmatprep.subr.bf16.mxu0 0
    %842 = vmatpush1.bf16.xpose.msra.mxu0 0
    %843 = vmatprep.subr.bf16.mxu0 0
    %844 = vmatpush1.bf16.xpose.msra.mxu0 0
    %845 = vmatprep.subr.bf16.mxu0 0
    %846 = vmatpush1.bf16.xpose.msra.mxu0 0
    %847 = vmatprep.subr.bf16.mxu0 0
    %848 = vmatpush1.bf16.xpose.msra.mxu0 0
    %849 = vmatprep.subr.bf16.mxu0 0
    %850 = vmatpush1.bf16.xpose.msra.mxu0 0
    %851 = vmatprep.subr.bf16.mxu0 0
    %852 = vmatpush1.bf16.xpose.msra.mxu0 0
    %853 = vmatprep.subr.bf16.mxu0 0
    %854 = vmatpush1.bf16.xpose.msra.mxu0 0
    %855 = vmatprep.subr.bf16.mxu0 0
    %856 = vmatpush1.bf16.xpose.msra.mxu0 0
    %857 = vmatprep.mubr.bf16.mxu0 %v800
    %858 = vmatmul.mubr.bf16.gmra.mrb[0].mxu0 %v799
    %v859 = vpop.f32.mrb[0].mxu0
    %v860 = vadd.f32 0.0, %v859
    %v861 = vpop.f32.mrb[0].mxu0
    %v862 = vpop.f32.mrb[0].mxu0
    %v863 = vadd.f32 0.0, %v862
    %v864 = vpop.f32.mrb[0].mxu0
    %865 = vdwg.mxu0
    %v866 = vadd.f32 %v701, %v860
    %v867 = vadd.f32 %v702, %v863
    %s868 = sld [smem:[#allocation2 + $0x4]]
    %v869 = vstv %s868
    %v870 = vmul.f32 %v83, %v869
    %v871 = vmul.f32 %v84, %v869
    %v872 = vmul.f32 %v85, %v869
    %v873 = vmul.f32 %v86, %v869
    %s874 = sld [smem:[#allocation2 + $0xc]]
    %v875 = vstv %s874
    %v876 = vmul.f32 %v100, %v875
    %v877 = vmul.f32 %v101, %v875
    %v878 = vmul.f32 %v102, %v875
    %v879 = vmul.f32 %v103, %v875
    %v880 = vadd.f32 %v870, %v876
    %v881 = vadd.f32 %v871, %v877
    %v882 = vadd.f32 %v872, %v878
    %v883 = vadd.f32 %v873, %v879
    %s884 = sld [smem:[#allocation2 + $0x14]]
    %v885 = vstv %s884
    %v886 = vmul.f32 %v119, %v885
    %v887 = vmul.f32 %v120, %v885
    %v888 = vmul.f32 %v121, %v885
    %v889 = vmul.f32 %v122, %v885
    %v890 = vadd.f32 %v880, %v886
    %v891 = vadd.f32 %v881, %v887
    %v892 = vadd.f32 %v882, %v888
    %v893 = vadd.f32 %v883, %v889
    %s894 = sld [smem:[#allocation2 + $0x1c]]
    %v895 = vstv %s894
    %v896 = vmul.f32 %v136, %v895
    %v897 = vmul.f32 %v137, %v895
    %v898 = vmul.f32 %v138, %v895
    %v899 = vmul.f32 %v139, %v895
    %v900 = vadd.f32 %v890, %v896
    %v901 = vadd.f32 %v891, %v897
    %v902 = vadd.f32 %v892, %v898
    %v903 = vadd.f32 %v893, %v899
    %s904 = sld [smem:[#allocation2 + $0x24]]
    %v905 = vstv %s904
    %v906 = vmul.f32 %v64, %v905
    %v907 = vmul.f32 %v65, %v905
    %v908 = vmul.f32 %v66, %v905
    %v909 = vmul.f32 %v67, %v905
    %v910 = vadd.f32 %v900, %v906
    %v911 = vadd.f32 %v901, %v907
    %v912 = vadd.f32 %v902, %v908
    %v913 = vadd.f32 %v903, %v909
    %s914 = sld [smem:[#allocation2 + $0x2c]]
    %v915 = vstv %s914
    %v916 = vmul.f32 %v153, %v915
    %v917 = vmul.f32 %v154, %v915
    %v918 = vmul.f32 %v155, %v915
    %v919 = vmul.f32 %v156, %v915
    %v920 = vadd.f32 %v910, %v916
    %v921 = vadd.f32 %v911, %v917
    %v922 = vadd.f32 %v912, %v918
    %v923 = vadd.f32 %v913, %v919
    %s924 = sld [smem:[#allocation2 + $0x34]]
    %v925 = vstv %s924
    %v926 = vmul.f32 %v172, %v925
    %v927 = vmul.f32 %v173, %v925
    %v928 = vmul.f32 %v174, %v925
    %v929 = vmul.f32 %v175, %v925
    %v930 = vadd.f32 %v920, %v926
    %v931 = vadd.f32 %v921, %v927
    %v932 = vadd.f32 %v922, %v928
    %v933 = vadd.f32 %v923, %v929
    %s934 = sld [smem:[#allocation2 + $0x3c]]
    %v935 = vstv %s934
    %v936 = vmul.f32 %v189, %v935
    %v937 = vmul.f32 %v190, %v935
    %v938 = vmul.f32 %v191, %v935
    %v939 = vmul.f32 %v192, %v935
    %v940 = vadd.f32 %v930, %v936
    %v941 = vadd.f32 %v931, %v937
    %v942 = vadd.f32 %v932, %v938
    %v943 = vadd.f32 %v933, %v939
    %s944 = sld [smem:[#allocation2 + $0x44]]
    %v945 = vstv %s944
    %v946 = vmul.f32 %v208, %v945
    %v947 = vmul.f32 %v209, %v945
    %v948 = vmul.f32 %v210, %v945
    %v949 = vmul.f32 %v211, %v945
    %v950 = vadd.f32 %v940, %v946
    %v951 = vadd.f32 %v941, %v947
    %v952 = vadd.f32 %v942, %v948
    %v953 = vadd.f32 %v943, %v949
    %s954 = sld [smem:[#allocation4 + $0x4]]
    %v955 = vstv %s954
    %v956 = vadd.f32 %v950, %v955
    %v957 = vadd.f32 %v951, %v955
    %v958 = vadd.f32 %v952, %v955
    %v959 = vadd.f32 %v953, %v955
    %v960 = vmax.f32 %v956, 0.0
    %v961 = vmax.f32 %v957, 0.0
    %v962 = vmax.f32 %v958, 0.0
    %v963 = vmax.f32 %v959, 0.0
    %v964 = vpack.c.bf16 %v962, %v960
    %v965 = vpack.c.bf16 %v963, %v961
    %v966 = vld [vmem:[%s3 + $0x20] sm:$0xff]
    %v967 = vld [vmem:[%s3 + $0x60] sm:$0xff]
    %v968 = vld [vmem:[%s3 + $0xa0] sm:$0xff]
    %v969 = vld [vmem:[%s3 + $0xe0] sm:$0xff]
    %v974 = vunpack.c.l.b16 %v966
    %v975 = vunpack.c.h.b16 %v966
    %v976 = vunpack.c.l.b16 %v967
    %v977 = vunpack.c.h.b16 %v967
    %v978 = vunpack.c.l.b16 %v968
    %v979 = vunpack.c.h.b16 %v968
    %v980 = vunpack.c.l.b16 %v969
    %v981 = vunpack.c.h.b16 %v969
    %v982 = vpack.c.b16 %v976, %v974
    %v983 = vpack.c.b16 %v977, %v975
    %v984 = vpack.c.b16 %v980, %v978
    %v985 = vpack.c.b16 %v981, %v979
    %990 = vmatprep.subr.bf16.mxu0 %v983
    %991 = vmatpush1.bf16.xpose.msra.mxu0 %v982
    %992 = vmatprep.subr.bf16.mxu0 %v985
    %993 = vmatpush1.bf16.xpose.msra.mxu0 %v984
    %994 = vmatprep.subr.bf16.mxu0 0
    %995 = vmatpush1.bf16.xpose.msra.mxu0 0
    %996 = vmatprep.subr.bf16.mxu0 0
    %997 = vmatpush1.bf16.xpose.msra.mxu0 0
    %998 = vmatprep.subr.bf16.mxu0 0
    %999 = vmatpush1.bf16.xpose.msra.mxu0 0
    %1000 = vmatprep.subr.bf16.mxu0 0
    %1001 = vmatpush1.bf16.xpose.msra.mxu0 0
    %1002 = vmatprep.subr.bf16.mxu0 0
    %1003 = vmatpush1.bf16.xpose.msra.mxu0 0
    %1004 = vmatprep.subr.bf16.mxu0 0
    %1005 = vmatpush1.bf16.xpose.msra.mxu0 0
    %1006 = vmatprep.subr.bf16.mxu0 0
    %1007 = vmatpush1.bf16.xpose.msra.mxu0 0
    %1008 = vmatprep.subr.bf16.mxu0 0
    %1009 = vmatpush1.bf16.xpose.msra.mxu0 0
    %1010 = vmatprep.subr.bf16.mxu0 0
    %1011 = vmatpush1.bf16.xpose.msra.mxu0 0
    %1012 = vmatprep.subr.bf16.mxu0 0
    %1013 = vmatpush1.bf16.xpose.msra.mxu0 0
    %1014 = vmatprep.subr.bf16.mxu0 0
    %1015 = vmatpush1.bf16.xpose.msra.mxu0 0
    %1016 = vmatprep.subr.bf16.mxu0 0
    %1017 = vmatpush1.bf16.xpose.msra.mxu0 0
    %1018 = vmatprep.subr.bf16.mxu0 0
    %1019 = vmatpush1.bf16.xpose.msra.mxu0 0
    %1020 = vmatprep.subr.bf16.mxu0 0
    %1021 = vmatpush1.bf16.xpose.msra.mxu0 0
    %1022 = vmatprep.mubr.bf16.mxu0 %v965
    %1023 = vmatmul.mubr.bf16.gmra.mrb[0].mxu0 %v964
    %v1024 = vpop.f32.mrb[0].mxu0
    %v1025 = vadd.f32 0.0, %v1024
    %v1026 = vpop.f32.mrb[0].mxu0
    %v1027 = vpop.f32.mrb[0].mxu0
    %v1028 = vadd.f32 0.0, %v1027
    %v1029 = vpop.f32.mrb[0].mxu0
    %1030 = vdwg.mxu0
    %v1031 = vadd.f32 %v866, %v1025
    %v1032 = vadd.f32 %v867, %v1028
    %s1033 = sld [smem:[#allocation2 + $0x5]]
    %v1034 = vstv %s1033
    %v1035 = vmul.f32 %v83, %v1034
    %v1036 = vmul.f32 %v84, %v1034
    %v1037 = vmul.f32 %v85, %v1034
    %v1038 = vmul.f32 %v86, %v1034
    %s1039 = sld [smem:[#allocation2 + $0xd]]
    %v1040 = vstv %s1039
    %v1041 = vmul.f32 %v100, %v1040
    %v1042 = vmul.f32 %v101, %v1040
    %v1043 = vmul.f32 %v102, %v1040
    %v1044 = vmul.f32 %v103, %v1040
    %v1045 = vadd.f32 %v1035, %v1041
    %v1046 = vadd.f32 %v1036, %v1042
    %v1047 = vadd.f32 %v1037, %v1043
    %v1048 = vadd.f32 %v1038, %v1044
    %s1049 = sld [smem:[#allocation2 + $0x15]]
    %v1050 = vstv %s1049
    %v1051 = vmul.f32 %v119, %v1050
    %v1052 = vmul.f32 %v120, %v1050
    %v1053 = vmul.f32 %v121, %v1050
    %v1054 = vmul.f32 %v122, %v1050
    %v1055 = vadd.f32 %v1045, %v1051
    %v1056 = vadd.f32 %v1046, %v1052
    %v1057 = vadd.f32 %v1047, %v1053
    %v1058 = vadd.f32 %v1048, %v1054
    %s1059 = sld [smem:[#allocation2 + $0x1d]]
    %v1060 = vstv %s1059
    %v1061 = vmul.f32 %v136, %v1060
    %v1062 = vmul.f32 %v137, %v1060
    %v1063 = vmul.f32 %v138, %v1060
    %v1064 = vmul.f32 %v139, %v1060
    %v1065 = vadd.f32 %v1055, %v1061
    %v1066 = vadd.f32 %v1056, %v1062
    %v1067 = vadd.f32 %v1057, %v1063
    %v1068 = vadd.f32 %v1058, %v1064
    %s1069 = sld [smem:[#allocation2 + $0x25]]
    %v1070 = vstv %s1069
    %v1071 = vmul.f32 %v64, %v1070
    %v1072 = vmul.f32 %v65, %v1070
    %v1073 = vmul.f32 %v66, %v1070
    %v1074 = vmul.f32 %v67, %v1070
    %v1075 = vadd.f32 %v1065, %v1071
    %v1076 = vadd.f32 %v1066, %v1072
    %v1077 = vadd.f32 %v1067, %v1073
    %v1078 = vadd.f32 %v1068, %v1074
    %s1079 = sld [smem:[#allocation2 + $0x2d]]
    %v1080 = vstv %s1079
    %v1081 = vmul.f32 %v153, %v1080
    %v1082 = vmul.f32 %v154, %v1080
    %v1083 = vmul.f32 %v155, %v1080
    %v1084 = vmul.f32 %v156, %v1080
    %v1085 = vadd.f32 %v1075, %v1081
    %v1086 = vadd.f32 %v1076, %v1082
    %v1087 = vadd.f32 %v1077, %v1083
    %v1088 = vadd.f32 %v1078, %v1084
    %s1089 = sld [smem:[#allocation2 + $0x35]]
    %v1090 = vstv %s1089
    %v1091 = vmul.f32 %v172, %v1090
    %v1092 = vmul.f32 %v173, %v1090
    %v1093 = vmul.f32 %v174, %v1090
    %v1094 = vmul.f32 %v175, %v1090
    %v1095 = vadd.f32 %v1085, %v1091
    %v1096 = vadd.f32 %v1086, %v1092
    %v1097 = vadd.f32 %v1087, %v1093
    %v1098 = vadd.f32 %v1088, %v1094
    %s1099 = sld [smem:[#allocation2 + $0x3d]]
    %v1100 = vstv %s1099
    %v1101 = vmul.f32 %v189, %v1100
    %v1102 = vmul.f32 %v190, %v1100
    %v1103 = vmul.f32 %v191, %v1100
    %v1104 = vmul.f32 %v192, %v1100
    %v1105 = vadd.f32 %v1095, %v1101
    %v1106 = vadd.f32 %v1096, %v1102
    %v1107 = vadd.f32 %v1097, %v1103
    %v1108 = vadd.f32 %v1098, %v1104
    %s1109 = sld [smem:[#allocation2 + $0x45]]
    %v1110 = vstv %s1109
    %v1111 = vmul.f32 %v208, %v1110
    %v1112 = vmul.f32 %v209, %v1110
    %v1113 = vmul.f32 %v210, %v1110
    %v1114 = vmul.f32 %v211, %v1110
    %v1115 = vadd.f32 %v1105, %v1111
    %v1116 = vadd.f32 %v1106, %v1112
    %v1117 = vadd.f32 %v1107, %v1113
    %v1118 = vadd.f32 %v1108, %v1114
    %s1119 = sld [smem:[#allocation4 + $0x5]]
    %v1120 = vstv %s1119
    %v1121 = vadd.f32 %v1115, %v1120
    %v1122 = vadd.f32 %v1116, %v1120
    %v1123 = vadd.f32 %v1117, %v1120
    %v1124 = vadd.f32 %v1118, %v1120
    %v1125 = vmax.f32 %v1121, 0.0
    %v1126 = vmax.f32 %v1122, 0.0
    %v1127 = vmax.f32 %v1123, 0.0
    %v1128 = vmax.f32 %v1124, 0.0
    %v1129 = vpack.c.bf16 %v1127, %v1125
    %v1130 = vpack.c.bf16 %v1128, %v1126
    %v1131 = vld [vmem:[%s3 + $0x28] sm:$0xff]
    %v1132 = vld [vmem:[%s3 + $0x68] sm:$0xff]
    %v1133 = vld [vmem:[%s3 + $0xa8] sm:$0xff]
    %v1134 = vld [vmem:[%s3 + $0xe8] sm:$0xff]
    %v1139 = vunpack.c.l.b16 %v1131
    %v1140 = vunpack.c.h.b16 %v1131
    %v1141 = vunpack.c.l.b16 %v1132
    %v1142 = vunpack.c.h.b16 %v1132
    %v1143 = vunpack.c.l.b16 %v1133
    %v1144 = vunpack.c.h.b16 %v1133
    %v1145 = vunpack.c.l.b16 %v1134
    %v1146 = vunpack.c.h.b16 %v1134
    %v1147 = vpack.c.b16 %v1141, %v1139
    %v1148 = vpack.c.b16 %v1142, %v1140
    %v1149 = vpack.c.b16 %v1145, %v1143
    %v1150 = vpack.c.b16 %v1146, %v1144
    %1155 = vmatprep.subr.bf16.mxu0 %v1148
    %1156 = vmatpush1.bf16.xpose.msra.mxu0 %v1147
    %1157 = vmatprep.subr.bf16.mxu0 %v1150
    %1158 = vmatpush1.bf16.xpose.msra.mxu0 %v1149
    %1159 = vmatprep.subr.bf16.mxu0 0
    %1160 = vmatpush1.bf16.xpose.msra.mxu0 0
    %1161 = vmatprep.subr.bf16.mxu0 0
    %1162 = vmatpush1.bf16.xpose.msra.mxu0 0
    %1163 = vmatprep.subr.bf16.mxu0 0
    %1164 = vmatpush1.bf16.xpose.msra.mxu0 0
    %1165 = vmatprep.subr.bf16.mxu0 0
    %1166 = vmatpush1.bf16.xpose.msra.mxu0 0
    %1167 = vmatprep.subr.bf16.mxu0 0
    %1168 = vmatpush1.bf16.xpose.msra.mxu0 0
    %1169 = vmatprep.subr.bf16.mxu0 0
    %1170 = vmatpush1.bf16.xpose.msra.mxu0 0
    %1171 = vmatprep.subr.bf16.mxu0 0
    %1172 = vmatpush1.bf16.xpose.msra.mxu0 0
    %1173 = vmatprep.subr.bf16.mxu0 0
    %1174 = vmatpush1.bf16.xpose.msra.mxu0 0
    %1175 = vmatprep.subr.bf16.mxu0 0
    %1176 = vmatpush1.bf16.xpose.msra.mxu0 0
    %1177 = vmatprep.subr.bf16.mxu0 0
    %1178 = vmatpush1.bf16.xpose.msra.mxu0 0
    %1179 = vmatprep.subr.bf16.mxu0 0
    %1180 = vmatpush1.bf16.xpose.msra.mxu0 0
    %1181 = vmatprep.subr.bf16.mxu0 0
    %1182 = vmatpush1.bf16.xpose.msra.mxu0 0
    %1183 = vmatprep.subr.bf16.mxu0 0
    %1184 = vmatpush1.bf16.xpose.msra.mxu0 0
    %1185 = vmatprep.subr.bf16.mxu0 0
    %1186 = vmatpush1.bf16.xpose.msra.mxu0 0
    %1187 = vmatprep.mubr.bf16.mxu0 %v1130
    %1188 = vmatmul.mubr.bf16.gmra.mrb[0].mxu0 %v1129
    %v1189 = vpop.f32.mrb[0].mxu0
    %v1190 = vadd.f32 0.0, %v1189
    %v1191 = vpop.f32.mrb[0].mxu0
    %v1192 = vpop.f32.mrb[0].mxu0
    %v1193 = vadd.f32 0.0, %v1192
    %v1194 = vpop.f32.mrb[0].mxu0
    %1195 = vdwg.mxu0
    %v1196 = vadd.f32 %v1031, %v1190
    %v1197 = vadd.f32 %v1032, %v1193
    %s1198 = sld [smem:[#allocation2 + $0x6]]
    %v1199 = vstv %s1198
    %v1200 = vmul.f32 %v83, %v1199
    %v1201 = vmul.f32 %v84, %v1199
    %v1202 = vmul.f32 %v85, %v1199
    %v1203 = vmul.f32 %v86, %v1199
    %s1204 = sld [smem:[#allocation2 + $0xe]]
    %v1205 = vstv %s1204
    %v1206 = vmul.f32 %v100, %v1205
    %v1207 = vmul.f32 %v101, %v1205
    %v1208 = vmul.f32 %v102, %v1205
    %v1209 = vmul.f32 %v103, %v1205
    %v1210 = vadd.f32 %v1200, %v1206
    %v1211 = vadd.f32 %v1201, %v1207
    %v1212 = vadd.f32 %v1202, %v1208
    %v1213 = vadd.f32 %v1203, %v1209
    %s1214 = sld [smem:[#allocation2 + $0x16]]
    %v1215 = vstv %s1214
    %v1216 = vmul.f32 %v119, %v1215
    %v1217 = vmul.f32 %v120, %v1215
    %v1218 = vmul.f32 %v121, %v1215
    %v1219 = vmul.f32 %v122, %v1215
    %v1220 = vadd.f32 %v1210, %v1216
    %v1221 = vadd.f32 %v1211, %v1217
    %v1222 = vadd.f32 %v1212, %v1218
    %v1223 = vadd.f32 %v1213, %v1219
    %s1224 = sld [smem:[#allocation2 + $0x1e]]
    %v1225 = vstv %s1224
    %v1226 = vmul.f32 %v136, %v1225
    %v1227 = vmul.f32 %v137, %v1225
    %v1228 = vmul.f32 %v138, %v1225
    %v1229 = vmul.f32 %v139, %v1225
    %v1230 = vadd.f32 %v1220, %v1226
    %v1231 = vadd.f32 %v1221, %v1227
    %v1232 = vadd.f32 %v1222, %v1228
    %v1233 = vadd.f32 %v1223, %v1229
    %s1234 = sld [smem:[#allocation2 + $0x26]]
    %v1235 = vstv %s1234
    %v1236 = vmul.f32 %v64, %v1235
    %v1237 = vmul.f32 %v65, %v1235
    %v1238 = vmul.f32 %v66, %v1235
    %v1239 = vmul.f32 %v67, %v1235
    %v1240 = vadd.f32 %v1230, %v1236
    %v1241 = vadd.f32 %v1231, %v1237
    %v1242 = vadd.f32 %v1232, %v1238
    %v1243 = vadd.f32 %v1233, %v1239
    %s1244 = sld [smem:[#allocation2 + $0x2e]]
    %v1245 = vstv %s1244
    %v1246 = vmul.f32 %v153, %v1245
    %v1247 = vmul.f32 %v154, %v1245
    %v1248 = vmul.f32 %v155, %v1245
    %v1249 = vmul.f32 %v156, %v1245
    %v1250 = vadd.f32 %v1240, %v1246
    %v1251 = vadd.f32 %v1241, %v1247
    %v1252 = vadd.f32 %v1242, %v1248
    %v1253 = vadd.f32 %v1243, %v1249
    %s1254 = sld [smem:[#allocation2 + $0x36]]
    %v1255 = vstv %s1254
    %v1256 = vmul.f32 %v172, %v1255
    %v1257 = vmul.f32 %v173, %v1255
    %v1258 = vmul.f32 %v174, %v1255
    %v1259 = vmul.f32 %v175, %v1255
    %v1260 = vadd.f32 %v1250, %v1256
    %v1261 = vadd.f32 %v1251, %v1257
    %v1262 = vadd.f32 %v1252, %v1258
    %v1263 = vadd.f32 %v1253, %v1259
    %s1264 = sld [smem:[#allocation2 + $0x3e]]
    %v1265 = vstv %s1264
    %v1266 = vmul.f32 %v189, %v1265
    %v1267 = vmul.f32 %v190, %v1265
    %v1268 = vmul.f32 %v191, %v1265
    %v1269 = vmul.f32 %v192, %v1265
    %v1270 = vadd.f32 %v1260, %v1266
    %v1271 = vadd.f32 %v1261, %v1267
    %v1272 = vadd.f32 %v1262, %v1268
    %v1273 = vadd.f32 %v1263, %v1269
    %s1274 = sld [smem:[#allocation2 + $0x46]]
    %v1275 = vstv %s1274
    %v1276 = vmul.f32 %v208, %v1275
    %v1277 = vmul.f32 %v209, %v1275
    %v1278 = vmul.f32 %v210, %v1275
    %v1279 = vmul.f32 %v211, %v1275
    %v1280 = vadd.f32 %v1270, %v1276
    %v1281 = vadd.f32 %v1271, %v1277
    %v1282 = vadd.f32 %v1272, %v1278
    %v1283 = vadd.f32 %v1273, %v1279
    %s1284 = sld [smem:[#allocation4 + $0x6]]
    %v1285 = vstv %s1284
    %v1286 = vadd.f32 %v1280, %v1285
    %v1287 = vadd.f32 %v1281, %v1285
    %v1288 = vadd.f32 %v1282, %v1285
    %v1289 = vadd.f32 %v1283, %v1285
    %v1290 = vmax.f32 %v1286, 0.0
    %v1291 = vmax.f32 %v1287, 0.0
    %v1292 = vmax.f32 %v1288, 0.0
    %v1293 = vmax.f32 %v1289, 0.0
    %v1294 = vpack.c.bf16 %v1292, %v1290
    %v1295 = vpack.c.bf16 %v1293, %v1291
    %v1296 = vld [vmem:[%s3 + $0x30] sm:$0xff]
    %v1297 = vld [vmem:[%s3 + $0x70] sm:$0xff]
    %v1298 = vld [vmem:[%s3 + $0xb0] sm:$0xff]
    %v1299 = vld [vmem:[%s3 + $0xf0] sm:$0xff]
    %v1304 = vunpack.c.l.b16 %v1296
    %v1305 = vunpack.c.h.b16 %v1296
    %v1306 = vunpack.c.l.b16 %v1297
    %v1307 = vunpack.c.h.b16 %v1297
    %v1308 = vunpack.c.l.b16 %v1298
    %v1309 = vunpack.c.h.b16 %v1298
    %v1310 = vunpack.c.l.b16 %v1299
    %v1311 = vunpack.c.h.b16 %v1299
    %v1312 = vpack.c.b16 %v1306, %v1304
    %v1313 = vpack.c.b16 %v1307, %v1305
    %v1314 = vpack.c.b16 %v1310, %v1308
    %v1315 = vpack.c.b16 %v1311, %v1309
    %1320 = vmatprep.subr.bf16.mxu0 %v1313
    %1321 = vmatpush1.bf16.xpose.msra.mxu0 %v1312
    %1322 = vmatprep.subr.bf16.mxu0 %v1315
    %1323 = vmatpush1.bf16.xpose.msra.mxu0 %v1314
    %1324 = vmatprep.subr.bf16.mxu0 0
    %1325 = vmatpush1.bf16.xpose.msra.mxu0 0
    %1326 = vmatprep.subr.bf16.mxu0 0
    %1327 = vmatpush1.bf16.xpose.msra.mxu0 0
    %1328 = vmatprep.subr.bf16.mxu0 0
    %1329 = vmatpush1.bf16.xpose.msra.mxu0 0
    %1330 = vmatprep.subr.bf16.mxu0 0
    %1331 = vmatpush1.bf16.xpose.msra.mxu0 0
    %1332 = vmatprep.subr.bf16.mxu0 0
    %1333 = vmatpush1.bf16.xpose.msra.mxu0 0
    %1334 = vmatprep.subr.bf16.mxu0 0
    %1335 = vmatpush1.bf16.xpose.msra.mxu0 0
    %1336 = vmatprep.subr.bf16.mxu0 0
    %1337 = vmatpush1.bf16.xpose.msra.mxu0 0
    %1338 = vmatprep.subr.bf16.mxu0 0
    %1339 = vmatpush1.bf16.xpose.msra.mxu0 0
    %1340 = vmatprep.subr.bf16.mxu0 0
    %1341 = vmatpush1.bf16.xpose.msra.mxu0 0
    %1342 = vmatprep.subr.bf16.mxu0 0
    %1343 = vmatpush1.bf16.xpose.msra.mxu0 0
    %1344 = vmatprep.subr.bf16.mxu0 0
    %1345 = vmatpush1.bf16.xpose.msra.mxu0 0
    %1346 = vmatprep.subr.bf16.mxu0 0
    %1347 = vmatpush1.bf16.xpose.msra.mxu0 0
    %1348 = vmatprep.subr.bf16.mxu0 0
    %1349 = vmatpush1.bf16.xpose.msra.mxu0 0
    %1350 = vmatprep.subr.bf16.mxu0 0
    %1351 = vmatpush1.bf16.xpose.msra.mxu0 0
    %1352 = vmatprep.mubr.bf16.mxu0 %v1295
    %1353 = vmatmul.mubr.bf16.gmra.mrb[0].mxu0 %v1294
    %v1354 = vpop.f32.mrb[0].mxu0
    %v1355 = vadd.f32 0.0, %v1354
    %v1356 = vpop.f32.mrb[0].mxu0
    %v1357 = vpop.f32.mrb[0].mxu0
    %v1358 = vadd.f32 0.0, %v1357
    %v1359 = vpop.f32.mrb[0].mxu0
    %1360 = vdwg.mxu0
    %v1361 = vadd.f32 %v1196, %v1355
    %v1362 = vadd.f32 %v1197, %v1358
    %s1363 = sld [smem:[#allocation2 + $0x7]]
    %v1364 = vstv %s1363
    %v1365 = vmul.f32 %v83, %v1364
    %v1366 = vmul.f32 %v84, %v1364
    %v1367 = vmul.f32 %v85, %v1364
    %v1368 = vmul.f32 %v86, %v1364
    %s1369 = sld [smem:[#allocation2 + $0xf]]
    %v1370 = vstv %s1369
    %v1371 = vmul.f32 %v100, %v1370
    %v1372 = vmul.f32 %v101, %v1370
    %v1373 = vmul.f32 %v102, %v1370
    %v1374 = vmul.f32 %v103, %v1370
    %v1375 = vadd.f32 %v1365, %v1371
    %v1376 = vadd.f32 %v1366, %v1372
    %v1377 = vadd.f32 %v1367, %v1373
    %v1378 = vadd.f32 %v1368, %v1374
    %s1379 = sld [smem:[#allocation2 + $0x17]]
    %v1380 = vstv %s1379
    %v1381 = vmul.f32 %v119, %v1380
    %v1382 = vmul.f32 %v120, %v1380
    %v1383 = vmul.f32 %v121, %v1380
    %v1384 = vmul.f32 %v122, %v1380
    %v1385 = vadd.f32 %v1375, %v1381
    %v1386 = vadd.f32 %v1376, %v1382
    %v1387 = vadd.f32 %v1377, %v1383
    %v1388 = vadd.f32 %v1378, %v1384
    %s1389 = sld [smem:[#allocation2 + $0x1f]]
    %v1390 = vstv %s1389
    %v1391 = vmul.f32 %v136, %v1390
    %v1392 = vmul.f32 %v137, %v1390
    %v1393 = vmul.f32 %v138, %v1390
    %v1394 = vmul.f32 %v139, %v1390
    %v1395 = vadd.f32 %v1385, %v1391
    %v1396 = vadd.f32 %v1386, %v1392
    %v1397 = vadd.f32 %v1387, %v1393
    %v1398 = vadd.f32 %v1388, %v1394
    %s1399 = sld [smem:[#allocation2 + $0x27]]
    %v1400 = vstv %s1399
    %v1401 = vmul.f32 %v64, %v1400
    %v1402 = vmul.f32 %v65, %v1400
    %v1403 = vmul.f32 %v66, %v1400
    %v1404 = vmul.f32 %v67, %v1400
    %v1405 = vadd.f32 %v1395, %v1401
    %v1406 = vadd.f32 %v1396, %v1402
    %v1407 = vadd.f32 %v1397, %v1403
    %v1408 = vadd.f32 %v1398, %v1404
    %s1409 = sld [smem:[#allocation2 + $0x2f]]
    %v1410 = vstv %s1409
    %v1411 = vmul.f32 %v153, %v1410
    %v1412 = vmul.f32 %v154, %v1410
    %v1413 = vmul.f32 %v155, %v1410
    %v1414 = vmul.f32 %v156, %v1410
    %v1415 = vadd.f32 %v1405, %v1411
    %v1416 = vadd.f32 %v1406, %v1412
    %v1417 = vadd.f32 %v1407, %v1413
    %v1418 = vadd.f32 %v1408, %v1414
    %s1419 = sld [smem:[#allocation2 + $0x37]]
    %v1420 = vstv %s1419
    %v1421 = vmul.f32 %v172, %v1420
    %v1422 = vmul.f32 %v173, %v1420
    %v1423 = vmul.f32 %v174, %v1420
    %v1424 = vmul.f32 %v175, %v1420
    %v1425 = vadd.f32 %v1415, %v1421
    %v1426 = vadd.f32 %v1416, %v1422
    %v1427 = vadd.f32 %v1417, %v1423
    %v1428 = vadd.f32 %v1418, %v1424
    %s1429 = sld [smem:[#allocation2 + $0x3f]]
    %v1430 = vstv %s1429
    %v1431 = vmul.f32 %v189, %v1430
    %v1432 = vmul.f32 %v190, %v1430
    %v1433 = vmul.f32 %v191, %v1430
    %v1434 = vmul.f32 %v192, %v1430
    %v1435 = vadd.f32 %v1425, %v1431
    %v1436 = vadd.f32 %v1426, %v1432
    %v1437 = vadd.f32 %v1427, %v1433
    %v1438 = vadd.f32 %v1428, %v1434
    %s1439 = sld [smem:[#allocation2 + $0x47]]
    %v1440 = vstv %s1439
    %v1441 = vmul.f32 %v208, %v1440
    %v1442 = vmul.f32 %v209, %v1440
    %v1443 = vmul.f32 %v210, %v1440
    %v1444 = vmul.f32 %v211, %v1440
    %v1445 = vadd.f32 %v1435, %v1441
    %v1446 = vadd.f32 %v1436, %v1442
    %v1447 = vadd.f32 %v1437, %v1443
    %v1448 = vadd.f32 %v1438, %v1444
    %s1449 = sld [smem:[#allocation4 + $0x7]]
    %v1450 = vstv %s1449
    %v1451 = vadd.f32 %v1445, %v1450
    %v1452 = vadd.f32 %v1446, %v1450
    %v1453 = vadd.f32 %v1447, %v1450
    %v1454 = vadd.f32 %v1448, %v1450
    %v1455 = vmax.f32 %v1451, 0.0
    %v1456 = vmax.f32 %v1452, 0.0
    %v1457 = vmax.f32 %v1453, 0.0
    %v1458 = vmax.f32 %v1454, 0.0
    %v1459 = vpack.c.bf16 %v1457, %v1455
    %v1460 = vpack.c.bf16 %v1458, %v1456
    %v1461 = vld [vmem:[%s3 + $0x38] sm:$0xff]
    %v1462 = vld [vmem:[%s3 + $0x78] sm:$0xff]
    %v1463 = vld [vmem:[%s3 + $0xb8] sm:$0xff]
    %v1464 = vld [vmem:[%s3 + $0xf8] sm:$0xff]
    %v1469 = vunpack.c.l.b16 %v1461
    %v1470 = vunpack.c.h.b16 %v1461
    %v1471 = vunpack.c.l.b16 %v1462
    %v1472 = vunpack.c.h.b16 %v1462
    %v1473 = vunpack.c.l.b16 %v1463
    %v1474 = vunpack.c.h.b16 %v1463
    %v1475 = vunpack.c.l.b16 %v1464
    %v1476 = vunpack.c.h.b16 %v1464
    %v1477 = vpack.c.b16 %v1471, %v1469
    %v1478 = vpack.c.b16 %v1472, %v1470
    %v1479 = vpack.c.b16 %v1475, %v1473
    %v1480 = vpack.c.b16 %v1476, %v1474
    %1485 = vmatprep.subr.bf16.mxu0 %v1478
    %1486 = vmatpush1.bf16.xpose.msra.mxu0 %v1477
    %1487 = vmatprep.subr.bf16.mxu0 %v1480
    %1488 = vmatpush1.bf16.xpose.msra.mxu0 %v1479
    %1489 = vmatprep.subr.bf16.mxu0 0
    %1490 = vmatpush1.bf16.xpose.msra.mxu0 0
    %1491 = vmatprep.subr.bf16.mxu0 0
    %1492 = vmatpush1.bf16.xpose.msra.mxu0 0
    %1493 = vmatprep.subr.bf16.mxu0 0
    %1494 = vmatpush1.bf16.xpose.msra.mxu0 0
    %1495 = vmatprep.subr.bf16.mxu0 0
    %1496 = vmatpush1.bf16.xpose.msra.mxu0 0
    %1497 = vmatprep.subr.bf16.mxu0 0
    %1498 = vmatpush1.bf16.xpose.msra.mxu0 0
    %1499 = vmatprep.subr.bf16.mxu0 0
    %1500 = vmatpush1.bf16.xpose.msra.mxu0 0
    %1501 = vmatprep.subr.bf16.mxu0 0
    %1502 = vmatpush1.bf16.xpose.msra.mxu0 0
    %1503 = vmatprep.subr.bf16.mxu0 0
    %1504 = vmatpush1.bf16.xpose.msra.mxu0 0
    %1505 = vmatprep.subr.bf16.mxu0 0
    %1506 = vmatpush1.bf16.xpose.msra.mxu0 0
    %1507 = vmatprep.subr.bf16.mxu0 0
    %1508 = vmatpush1.bf16.xpose.msra.mxu0 0
    %1509 = vmatprep.subr.bf16.mxu0 0
    %1510 = vmatpush1.bf16.xpose.msra.mxu0 0
    %1511 = vmatprep.subr.bf16.mxu0 0
    %1512 = vmatpush1.bf16.xpose.msra.mxu0 0
    %1513 = vmatprep.subr.bf16.mxu0 0
    %1514 = vmatpush1.bf16.xpose.msra.mxu0 0
    %1515 = vmatprep.subr.bf16.mxu0 0
    %1516 = vmatpush1.bf16.xpose.msra.mxu0 0
    %1517 = vmatprep.mubr.bf16.mxu0 %v1460
    %1518 = vmatmul.mubr.bf16.gmra.mrb[0].mxu0 %v1459
    %v1519 = vpop.f32.mrb[0].mxu0
    %v1520 = vadd.f32 0.0, %v1519
    %v1521 = vpop.f32.mrb[0].mxu0
    %v1522 = vpop.f32.mrb[0].mxu0
    %v1523 = vadd.f32 0.0, %v1522
    %v1524 = vpop.f32.mrb[0].mxu0
    %1525 = vdwg.mxu0
    %v1526 = vadd.f32 %v1361, %v1520
    %v1527 = vadd.f32 %v1362, %v1523
    %v1528 = vld [vmem:[%s4] sm:$0x1]
    %v1530 = vlaneseq
    %v1531 = vshrl.u32 %v1530, 7
    %v1532 = vsub.s32 0, %v1531
    %v1533 = vrot.slane %v1528, %v1532
    %v1535 = vadd.f32 %v1526, %v1533
    %v1536 = vadd.f32 %v1527, %v1533
    %vm1537 = vcmask 261120
    %1538 = vst.msk [vmem:[%s5] sm:$0xff] %vm1537, %v1535
    %1539 = vst.msk [vmem:[%s5 + $0x8] sm:$0xff] %vm1537, %v1536
    // Predicated region
    $region30: #{triplet_forward.1} parent=1 // pred_check
      _
    $region31: #{triplet_forward.1} parent=1 // pred_check_branch
      %1541 = sbr.rel (0) target = $region33
    $region32: #{triplet_forward.1} parent=1 // pred_region
      _
    $region33: #{triplet_forward.1} parent=1 // pred_fallthru
      _
    // Predicated region
    $region34: #{triplet_forward.1} parent=1 // pred_check
      _
    $region35: #{triplet_forward.1} parent=1 // pred_check_branch
      %1543 = sbr.rel (0) target = $region37
    $region36: #{triplet_forward.1} parent=1 // pred_region
      _
    $region37: #{triplet_forward.1} parent=1 // pred_fallthru
      _
    %1544 = vsyncpa [#allocation3], 1
    %1545 = vsyncpa [#allocation5], 1

</llo_original>
